<compile_context>
chip_gen: v6e
topology: v6e:2x2x1
jax: 0.10.0
libtpu: 0.0.40
codegen_flags: <defaults>
</compile_context>

<pallas_src>
import functools
import math

import jax
import jax.numpy as jnp
from jax.experimental import pallas as pl
from jax.experimental.pallas import tpu as pltpu


def _layer_norm(x, gamma, beta, eps=1e-5):
    mean = jnp.mean(x, axis=-1, keepdims=True)
    var = jnp.mean(jnp.square(x - mean), axis=-1, keepdims=True)
    return (x - mean) * jax.lax.rsqrt(var + eps) * gamma + beta


def fused_encoder_kernel(x_ref, pos_ref,
                         wqkv_ref, bqkv_ref, wo_ref, bo_ref,
                         g1_ref, be1_ref,
                         w1_ref, b1_ref, w2_ref, b2_ref,
                         g2_ref, be2_ref,
                         gf_ref, bf_ref,
                         o_ref,
                         act_ref, kh_ref, vh_ref,
                         *, num_heads, q_tile, apply_final_norm, use_bf16_exp):
    layer = pl.program_id(1)
    num_layers = pl.num_programs(1)

    # Load the input activation into the resident VMEM accumulator at the first layer.
    @pl.when(layer == 0)
    def _():
        act_ref[...] = x_ref[0].astype(jnp.float32)

    S, D = act_ref.shape
    H = num_heads
    dh = D // H
    scale = 1.0 / math.sqrt(dh)

    x = act_ref[...]                             # (S, D) f32, carried across layers
    pos = pos_ref[0].astype(jnp.float32)         # (S, D) (bf16 in HBM)
    qk_in = (x + pos).astype(jnp.bfloat16)       # pos added to q and k only (DETR)
    x_bf = x.astype(jnp.bfloat16)

    wq = wqkv_ref[0, 0]                          # (D, D) bf16
    wk = wqkv_ref[0, 1]
    wv = wqkv_ref[0, 2]
    bq = bqkv_ref[0, 0]                          # (1, D) f32
    bk = bqkv_ref[0, 1]
    bv = bqkv_ref[0, 2]

    def split_heads(z_bf16):                     # (S', D) bf16 -> (H, S', dh) bf16
        s_rows = z_bf16.shape[0]
        return jnp.transpose(z_bf16.reshape(s_rows, H, dh), (1, 0, 2))

    # ---- Full-sequence K / V once per layer (resident in scratch for the Q-tile loop) ----
    k = jnp.dot(qk_in, wk, preferred_element_type=jnp.float32) + bk
    v = jnp.dot(x_bf, wv, preferred_element_type=jnp.float32) + bv
    kh_ref[...] = split_heads(k.astype(jnp.bfloat16))
    vh_ref[...] = split_heads(v.astype(jnp.bfloat16))
    kh = kh_ref[...]                             # (H, S, dh) bf16
    vh = vh_ref[...]

    wo = wo_ref[0]                               # (H, dh, D) bf16 (head merge folded in)
    bo = bo_ref[0]
    g1 = g1_ref[0]; be1 = be1_ref[0]
    w1 = w1_ref[0]; b1 = b1_ref[0]
    w2 = w2_ref[0]; b2 = b2_ref[0]
    g2 = g2_ref[0]; be2 = be2_ref[0]

    # ---- Flash-style query tiling: stream full K/V against Tq-row query blocks ----
    qs = 0
    while qs < S:
        tq = min(q_tile, S - qs)
        xq = x[qs:qs + tq]                                        # (tq, D) f32 residual

        q = jnp.dot(qk_in[qs:qs + tq], wq,
                    preferred_element_type=jnp.float32) + bq      # (tq, D) f32
        qh = split_heads((q * scale).astype(jnp.bfloat16))        # (H, tq, dh)

        scores = jnp.einsum('hqd,hkd->hqk', qh, kh,
                            preferred_element_type=jnp.float32)   # (H, tq, S) f32
        m = jnp.max(scores, axis=-1, keepdims=True)
        if use_bf16_exp:
            p = jnp.exp((scores - m).astype(jnp.bfloat16))        # bf16 EUP (v6e/v7x)
            denom = jnp.sum(p, axis=-1, keepdims=True, dtype=jnp.float32)
        else:
            p_f32 = jnp.exp(scores - m)                           # f32 EUP (v5e/other)
            denom = jnp.sum(p_f32, axis=-1, keepdims=True)
            p = p_f32.astype(jnp.bfloat16)

        ctx = jnp.einsum('hqk,hkd->hqd', p, vh,
                         preferred_element_type=jnp.float32)      # (H, tq, dh) unnormalized
        # Deferred softmax normalization: scale the small context, not the (H,tq,S) probs.
        ctx = ctx * pl.reciprocal(denom, approx=True)

        # Output projection with head merge folded into W_o (per-head accumulate on MXU).
        attn = jnp.einsum('hqd,hdo->hqo', ctx.astype(jnp.bfloat16), wo,
                          preferred_element_type=jnp.float32)     # (H, tq, D)
        attn = jnp.sum(attn, axis=0) + bo                         # (tq, D)

        y = _layer_norm(xq + attn, g1, be1)

        ff = jnp.dot(y.astype(jnp.bfloat16), w1,
                     preferred_element_type=jnp.float32) + b1
        ff = jnp.maximum(ff, 0.0)                                 # ReLU (f32)
        ff = jnp.dot(ff.astype(jnp.bfloat16), w2,
                     preferred_element_type=jnp.float32) + b2
        out = _layer_norm(y + ff, g2, be2)

        act_ref[qs:qs + tq, :] = out
        qs += tq

    # ---- Epilogue: optional final LayerNorm + store to HBM (once per batch row) ----
    @pl.when(layer == num_layers - 1)
    def _():
        final = act_ref[...]
        if apply_final_norm:
            final = _layer_norm(final, gf_ref[...], bf_ref[...])
        o_ref[0] = final.astype(o_ref.dtype)


def _device_kind():
    try:
        return jax.devices()[0].device_kind.lower()
    except Exception:
        return ""


def transformer_encoder_forward(src, pos, params, num_heads, q_tile=256):
    """Mirrors TransformerEncoder.forward: layer loop + optional final norm, fused."""
    B, S, D = src.shape
    L = params["wqkv"].shape[0]
    dh = D // num_heads

    apply_final_norm = params.get("norm_gamma") is not None
    gf = params["norm_gamma"] if apply_final_norm else jnp.ones((1, D), jnp.float32)
    bf = params["norm_beta"] if apply_final_norm else jnp.zeros((1, D), jnp.float32)

    kind = _device_kind()
    use_bf16_exp = ("v6" in kind) or ("v7" in kind)      # v5e has no bf16 EUP: keep f32 exp
    if "v7" in kind:
        vmem_limit = 48 * 1024 * 1024                    # 64 MiB physical per TC on v7x
    elif ("v6" in kind) or ("v5" in kind):
        vmem_limit = 64 * 1024 * 1024                    # 128 MiB physical
    else:
        vmem_limit = 32 * 1024 * 1024

    kernel = functools.partial(fused_encoder_kernel,
                               num_heads=num_heads,
                               q_tile=q_tile,
                               apply_final_norm=apply_final_norm,
                               use_bf16_exp=use_bf16_exp)

    def layer_spec(shape):
        # Per-layer weight: block = one layer's slab, indexed by the layer grid axis.
        n_trailing = len(shape) - 1
        return pl.BlockSpec((1,) + tuple(shape[1:]),
                            lambda b, l, n=n_trailing: (l,) + (0,) * n)

    def const_spec(shape):
        n = len(shape)
        return pl.BlockSpec(tuple(shape), lambda b, l, n=n: (0,) * n)

    in_specs = [
        pl.BlockSpec((1, S, D), lambda b, l: (b, 0, 0)),   # src  (resident across layers)
        pl.BlockSpec((1, S, D), lambda b, l: (b, 0, 0)),   # pos  (bf16, resident)
        layer_spec(params["wqkv"].shape),                  # (L, 3, D, D) bf16
        layer_spec(params["bqkv"].shape),                  # (L, 3, 1, D) f32
        layer_spec(params["wo"].shape),                    # (L, H, dh, D) bf16
        layer_spec(params["bo"].shape),                    # (L, 1, D)
        layer_spec(params["g1"].shape),                    # (L, 1, D)
        layer_spec(params["be1"].shape),                   # (L, 1, D)
        layer_spec(params["w1"].shape),                    # (L, D, dff) bf16
        layer_spec(params["b1"].shape),                    # (L, 1, dff)
        layer_spec(params["w2"].shape),                    # (L, dff, D) bf16
        layer_spec(params["b2"].shape),                    # (L, 1, D)
        layer_spec(params["g2"].shape),                    # (L, 1, D)
        layer_spec(params["be2"].shape),                   # (L, 1, D)
        const_spec(gf.shape),                              # final norm gamma
        const_spec(bf.shape),                              # final norm beta
    ]

    return pl.pallas_call(
        kernel,
        out_shape=jax.ShapeDtypeStruct((B, S, D), src.dtype),
        grid=(B, L),
        in_specs=in_specs,
        out_specs=pl.BlockSpec((1, S, D), lambda b, l: (b, 0, 0)),
        scratch_shapes=[
            pltpu.VMEM((S, D), jnp.float32),                     # resident activation
            pltpu.VMEM((num_heads, S, dh), jnp.bfloat16),        # K heads (per layer)
            pltpu.VMEM((num_heads, S, dh), jnp.bfloat16),        # V heads (per layer)
        ],
        compiler_params=pltpu.CompilerParams(
            dimension_semantics=("parallel", "arbitrary"),
            vmem_limit_bytes=vmem_limit,
        ),
    )(src, pos,
      params["wqkv"], params["bqkv"], params["wo"], params["bo"],
      params["g1"], params["be1"], params["w1"], params["b1"],
      params["w2"], params["b2"], params["g2"], params["be2"],
      gf, bf)


def init_params(key, num_layers, d_model, num_heads, dim_ff, with_final_norm=True):
    """Deterministic synthetic init.

    Linear weights are stored pre-transposed (in, out) so the kernel computes y = x @ W + b
    (PyTorch stores (out, in)), stacked over layers, in bf16. QKV is (L, 3, D, D); the output
    projection is pre-reshaped to (L, H, dh, D) so the head merge is folded into the matmul.
    """
    s = 0.05
    L, D, F, H = num_layers, d_model, dim_ff, num_heads
    dh = D // H

    def rand(k, shape, dtype=jnp.float32):
        return (s * jax.random.normal(k, shape, jnp.float32)).astype(dtype)

    ks = jax.random.split(key, 8)
    return dict(
        wqkv=rand(ks[0], (L, 3, D, D), jnp.bfloat16),
        bqkv=rand(ks[1], (L, 3, 1, D)),
        wo=rand(ks[2], (L, H, dh, D), jnp.bfloat16),
        bo=rand(ks[3], (L, 1, D)),
        g1=jnp.ones((L, 1, D), jnp.float32),
        be1=jnp.zeros((L, 1, D), jnp.float32),
        w1=rand(ks[4], (L, D, F), jnp.bfloat16),
        b1=rand(ks[5], (L, 1, F)),
        w2=rand(ks[6], (L, F, D), jnp.bfloat16),
        b2=rand(ks[7], (L, 1, D)),
        g2=jnp.ones((L, 1, D), jnp.float32),
        be2=jnp.zeros((L, 1, D), jnp.float32),
        norm_gamma=jnp.ones((1, D), jnp.float32) if with_final_norm else None,
        norm_beta=jnp.zeros((1, D), jnp.float32) if with_final_norm else None,
    )


def reference_forward(src, pos, params, num_heads):
    """Pure-JAX f32 reference with the same weight format (weights upcast from bf16)."""
    B, S, D = src.shape
    L = params["wqkv"].shape[0]
    H = num_heads
    dh = D // H
    x = src.astype(jnp.float32)
    pos = pos.astype(jnp.float32)
    for l in range(L):
        wq = params["wqkv"][l, 0].astype(jnp.float32)
        wk = params["wqkv"][l, 1].astype(jnp.float32)
        wv = params["wqkv"][l, 2].astype(jnp.float32)
        bq, bk, bv = (params["bqkv"][l, i] for i in range(3))
        wo = params["wo"][l].astype(jnp.float32).reshape(H * dh, D)
        bo = params["bo"][l]

        qk_in = x + pos
        q = qk_in @ wq + bq
        k = qk_in @ wk + bk
        v = x @ wv + bv
        q = q.reshape(B, S, H, dh).transpose(0, 2, 1, 3) / math.sqrt(dh)
        k = k.reshape(B, S, H, dh).transpose(0, 2, 1, 3)
        v = v.reshape(B, S, H, dh).transpose(0, 2, 1, 3)
        scores = jnp.einsum('bhqd,bhkd->bhqk', q, k)
        p = jax.nn.softmax(scores, axis=-1)
        ctx = jnp.einsum('bhqk,bhkd->bhqd', p, v)
        ctx = ctx.transpose(0, 2, 1, 3).reshape(B, S, D)
        attn = ctx @ wo + bo
        x = _layer_norm(x + attn, params["g1"][l], params["be1"][l])
        ff = jnp.maximum(x @ params["w1"][l].astype(jnp.float32) + params["b1"][l], 0.0)
        ff = ff @ params["w2"][l].astype(jnp.float32) + params["b2"][l]
        x = _layer_norm(x + ff, params["g2"][l], params["be2"][l])
    if params.get("norm_gamma") is not None:
        x = _layer_norm(x, params["norm_gamma"], params["norm_beta"])
    return x


if __name__ == "__main__":
    B, S, D = 2, 8, 32        # batch, sequence, d_model (toy shapes; not a perf config)
    NUM_HEADS = 4
    DIM_FF = 64
    NUM_LAYERS = 2

    key = jax.random.PRNGKey(0)
    k_src, k_pos, k_par = jax.random.split(key, 3)
    src = jax.random.normal(k_src, (B, S, D), jnp.float32)
    pos = jax.random.normal(k_pos, (B, S, D), jnp.float32).astype(jnp.bfloat16)
    params = init_params(k_par, NUM_LAYERS, D, NUM_HEADS, DIM_FF, with_final_norm=True)

    out = transformer_encoder_forward(src, pos, params, NUM_HEADS)
    out = jax.block_until_ready(out)

    ref = reference_forward(src, pos, params, NUM_HEADS)
    assert out.shape == (B, S, D)
    assert bool(jnp.all(jnp.isfinite(out)))
    max_err = float(jnp.max(jnp.abs(out - ref)))
    assert max_err < 0.1, f"max abs error vs reference: {max_err}"
    print("KERNEL_OK")
</pallas_src>

<mosaic_0001>
module attributes {stable_mosaic.version = 11 : i64} {
  func.func @fused_encoder_kernel(%arg0: i32, %arg1: i32, %arg2: memref<1x8x32xf32, #tpu.memory_space<vmem>>, %arg3: memref<1x8x32xbf16, #tpu.memory_space<vmem>>, %arg4: memref<1x3x32x32xbf16, #tpu.memory_space<vmem>>, %arg5: memref<1x3x1x32xf32, #tpu.memory_space<vmem>>, %arg6: memref<1x4x8x32xbf16, #tpu.memory_space<vmem>>, %arg7: memref<1x1x32xf32, #tpu.memory_space<vmem>>, %arg8: memref<1x1x32xf32, #tpu.memory_space<vmem>>, %arg9: memref<1x1x32xf32, #tpu.memory_space<vmem>>, %arg10: memref<1x32x64xbf16, #tpu.memory_space<vmem>>, %arg11: memref<1x1x64xf32, #tpu.memory_space<vmem>>, %arg12: memref<1x64x32xbf16, #tpu.memory_space<vmem>>, %arg13: memref<1x1x32xf32, #tpu.memory_space<vmem>>, %arg14: memref<1x1x32xf32, #tpu.memory_space<vmem>>, %arg15: memref<1x1x32xf32, #tpu.memory_space<vmem>>, %arg16: memref<1x32xf32, #tpu.memory_space<vmem>>, %arg17: memref<1x32xf32, #tpu.memory_space<vmem>>, %arg18: memref<1x8x32xf32, #tpu.memory_space<vmem>>, %arg19: memref<8x32xf32, #tpu.memory_space<vmem>>, %arg20: memref<4x8x8xbf16, #tpu.memory_space<vmem>>, %arg21: memref<4x8x8xbf16, #tpu.memory_space<vmem>>) attributes {dimension_semantics = [#tpu.dimension_semantics<parallel>, #tpu.dimension_semantics<arbitrary>], iteration_bounds = array<i64: 2, 2>, scalar_prefetch = 0 : i64, scratch_operands = 3 : i64, tpu.core_type = #tpu.core_type<tc>, window_params = [{transform_indices = @transform_0, window_bounds = array<i64: 1, 8, 32>}, {transform_indices = @transform_1, window_bounds = array<i64: 1, 8, 32>}, {transform_indices = @transform_2, window_bounds = array<i64: 1, 3, 32, 32>}, {transform_indices = @transform_3, window_bounds = array<i64: 1, 3, 1, 32>}, {transform_indices = @transform_4, window_bounds = array<i64: 1, 4, 8, 32>}, {transform_indices = @transform_5, window_bounds = array<i64: 1, 1, 32>}, {transform_indices = @transform_6, window_bounds = array<i64: 1, 1, 32>}, {transform_indices = @transform_7, window_bounds = array<i64: 1, 1, 32>}, {transform_indices = @transform_8, window_bounds = array<i64: 1, 32, 64>}, {transform_indices = @transform_9, window_bounds = array<i64: 1, 1, 64>}, {transform_indices = @transform_10, window_bounds = array<i64: 1, 64, 32>}, {transform_indices = @transform_11, window_bounds = array<i64: 1, 1, 32>}, {transform_indices = @transform_12, window_bounds = array<i64: 1, 1, 32>}, {transform_indices = @transform_13, window_bounds = array<i64: 1, 1, 32>}, {pipeline_mode = #tpu.pipeline_mode<synchronous>, transform_indices = @transform_14, window_bounds = array<i64: 1, 32>}, {pipeline_mode = #tpu.pipeline_mode<synchronous>, transform_indices = @transform_15, window_bounds = array<i64: 1, 32>}, {transform_indices = @transform_16, window_bounds = array<i64: 1, 8, 32>}]} {
    %c0_i32 = arith.constant 0 : i32
    %0 = arith.cmpi eq, %arg1, %c0_i32 : i32
    %1 = arith.extui %0 : i1 to i32
    %c0_i32_0 = arith.constant 0 : i32
    %2 = arith.cmpi ne, %1, %c0_i32_0 : i32
    scf.if %2 {
      %c0_95 = arith.constant 0 : index
      %c0_96 = arith.constant 0 : index
      %c0_97 = arith.constant 0 : index
      %144 = vector.load %arg2[%c0_95, %c0_96, %c0_97] : memref<1x8x32xf32, #tpu.memory_space<vmem>>, vector<1x8x32xf32>
      %145 = vector.shape_cast %144 : vector<1x8x32xf32> to vector<8x32xf32>
      %c0_98 = arith.constant 0 : index
      %c0_99 = arith.constant 0 : index
      %146 = vector.load %arg19[%c0_98, %c0_99] : memref<8x32xf32, #tpu.memory_space<vmem>>, vector<8x32xf32>
      tpu.vector_store %arg19[%c0_98, %c0_99], %145 {strides = array<i32>} : memref<8x32xf32, #tpu.memory_space<vmem>>, vector<8x32xf32>,
    } else {
    }
    %c0 = arith.constant 0 : index
    %c0_1 = arith.constant 0 : index
    %3 = vector.load %arg19[%c0, %c0_1] : memref<8x32xf32, #tpu.memory_space<vmem>>, vector<8x32xf32>
    %c0_2 = arith.constant 0 : index
    %c0_3 = arith.constant 0 : index
    %c0_4 = arith.constant 0 : index
    %4 = vector.load %arg3[%c0_2, %c0_3, %c0_4] : memref<1x8x32xbf16, #tpu.memory_space<vmem>>, vector<1x8x32xbf16>
    %5 = vector.shape_cast %4 : vector<1x8x32xbf16> to vector<8x32xbf16>
    %6 = arith.extf %5 : vector<8x32xbf16> to vector<8x32xf32>
    %7 = arith.addf %3, %6 : vector<8x32xf32>
    %8 = arith.truncf %7 : vector<8x32xf32> to vector<8x32xbf16>
    %9 = arith.truncf %3 : vector<8x32xf32> to vector<8x32xbf16>
    %c0_5 = arith.constant 0 : index
    %c0_6 = arith.constant 0 : index
    %c0_7 = arith.constant 0 : index
    %c0_8 = arith.constant 0 : index
    %10 = vector.load %arg4[%c0_5, %c0_6, %c0_7, %c0_8] : memref<1x3x32x32xbf16, #tpu.memory_space<vmem>>, vector<1x1x32x32xbf16>
    %11 = vector.shape_cast %10 : vector<1x1x32x32xbf16> to vector<32x32xbf16>
    %c0_9 = arith.constant 0 : index
    %c1 = arith.constant 1 : index
    %c0_10 = arith.constant 0 : index
    %c0_11 = arith.constant 0 : index
    %12 = vector.load %arg4[%c0_9, %c1, %c0_10, %c0_11] : memref<1x3x32x32xbf16, #tpu.memory_space<vmem>>, vector<1x1x32x32xbf16>
    %13 = vector.shape_cast %12 : vector<1x1x32x32xbf16> to vector<32x32xbf16>
    %c0_12 = arith.constant 0 : index
    %c2 = arith.constant 2 : index
    %c0_13 = arith.constant 0 : index
    %c0_14 = arith.constant 0 : index
    %14 = vector.load %arg4[%c0_12, %c2, %c0_13, %c0_14] : memref<1x3x32x32xbf16, #tpu.memory_space<vmem>>, vector<1x1x32x32xbf16>
    %15 = vector.shape_cast %14 : vector<1x1x32x32xbf16> to vector<32x32xbf16>
    %c0_15 = arith.constant 0 : index
    %c0_16 = arith.constant 0 : index
    %c0_17 = arith.constant 0 : index
    %c0_18 = arith.constant 0 : index
    %16 = vector.load %arg5[%c0_15, %c0_16, %c0_17, %c0_18] : memref<1x3x1x32xf32, #tpu.memory_space<vmem>>, vector<1x1x1x32xf32>
    %17 = vector.shape_cast %16 : vector<1x1x1x32xf32> to vector<1x32xf32>
    %c0_19 = arith.constant 0 : index
    %c1_20 = arith.constant 1 : index
    %c0_21 = arith.constant 0 : index
    %c0_22 = arith.constant 0 : index
    %18 = vector.load %arg5[%c0_19, %c1_20, %c0_21, %c0_22] : memref<1x3x1x32xf32, #tpu.memory_space<vmem>>, vector<1x1x1x32xf32>
    %19 = vector.shape_cast %18 : vector<1x1x1x32xf32> to vector<1x32xf32>
    %c0_23 = arith.constant 0 : index
    %c2_24 = arith.constant 2 : index
    %c0_25 = arith.constant 0 : index
    %c0_26 = arith.constant 0 : index
    %20 = vector.load %arg5[%c0_23, %c2_24, %c0_25, %c0_26] : memref<1x3x1x32xf32, #tpu.memory_space<vmem>>, vector<1x1x1x32xf32>
    %21 = vector.shape_cast %20 : vector<1x1x1x32xf32> to vector<1x32xf32>
    %cst = arith.constant dense<0.000000e+00> : vector<8x32xf32>
    %22 = tpu.matmul %8, %13, %cst {dimension_numbers = #tpu.dot_dimension_numbers<[1], [0], [0], [1], [0, 0, 1, 1], [], []>} : vector<8x32xbf16>, vector<32x32xbf16>, vector<8x32xf32> -> vector<8x32xf32>
    %23 = vector.broadcast %19 : vector<1x32xf32> to vector<8x32xf32>
    %24 = arith.addf %22, %23 : vector<8x32xf32>
    %cst_27 = arith.constant dense<0.000000e+00> : vector<8x32xf32>
    %25 = tpu.matmul %9, %15, %cst_27 {dimension_numbers = #tpu.dot_dimension_numbers<[1], [0], [0], [1], [0, 0, 1, 1], [], []>} : vector<8x32xbf16>, vector<32x32xbf16>, vector<8x32xf32> -> vector<8x32xf32>
    %26 = vector.broadcast %21 : vector<1x32xf32> to vector<8x32xf32>
    %27 = arith.addf %25, %26 : vector<8x32xf32>
    %28 = arith.truncf %24 : vector<8x32xf32> to vector<8x32xbf16>
    %29 = vector.shape_cast %28 : vector<8x32xbf16> to vector<8x4x8xbf16>
    %30 = tpu.transpose %29, [1, 0, 2] : vector<8x4x8xbf16> -> vector<4x8x8xbf16>
    %c0_28 = arith.constant 0 : index
    %c0_29 = arith.constant 0 : index
    %c0_30 = arith.constant 0 : index
    %31 = vector.load %arg20[%c0_28, %c0_29, %c0_30] : memref<4x8x8xbf16, #tpu.memory_space<vmem>>, vector<4x8x8xbf16>
    tpu.vector_store %arg20[%c0_28, %c0_29, %c0_30], %30 {strides = array<i32>} : memref<4x8x8xbf16, #tpu.memory_space<vmem>>, vector<4x8x8xbf16>,
    %32 = arith.truncf %27 : vector<8x32xf32> to vector<8x32xbf16>
    %33 = vector.shape_cast %32 : vector<8x32xbf16> to vector<8x4x8xbf16>
    %34 = tpu.transpose %33, [1, 0, 2] : vector<8x4x8xbf16> -> vector<4x8x8xbf16>
    %c0_31 = arith.constant 0 : index
    %c0_32 = arith.constant 0 : index
    %c0_33 = arith.constant 0 : index
    %35 = vector.load %arg21[%c0_31, %c0_32, %c0_33] : memref<4x8x8xbf16, #tpu.memory_space<vmem>>, vector<4x8x8xbf16>
    tpu.vector_store %arg21[%c0_31, %c0_32, %c0_33], %34 {strides = array<i32>} : memref<4x8x8xbf16, #tpu.memory_space<vmem>>, vector<4x8x8xbf16>,
    %c0_34 = arith.constant 0 : index
    %c0_35 = arith.constant 0 : index
    %c0_36 = arith.constant 0 : index
    %36 = vector.load %arg20[%c0_34, %c0_35, %c0_36] : memref<4x8x8xbf16, #tpu.memory_space<vmem>>, vector<4x8x8xbf16>
    %c0_37 = arith.constant 0 : index
    %c0_38 = arith.constant 0 : index
    %c0_39 = arith.constant 0 : index
    %37 = vector.load %arg21[%c0_37, %c0_38, %c0_39] : memref<4x8x8xbf16, #tpu.memory_space<vmem>>, vector<4x8x8xbf16>
    %c0_40 = arith.constant 0 : index
    %c0_41 = arith.constant 0 : index
    %c0_42 = arith.constant 0 : index
    %c0_43 = arith.constant 0 : index
    %38 = vector.load %arg6[%c0_40, %c0_41, %c0_42, %c0_43] : memref<1x4x8x32xbf16, #tpu.memory_space<vmem>>, vector<1x4x8x32xbf16>
    %39 = vector.shape_cast %38 : vector<1x4x8x32xbf16> to vector<4x8x32xbf16>
    %c0_44 = arith.constant 0 : index
    %c0_45 = arith.constant 0 : index
    %c0_46 = arith.constant 0 : index
    %40 = vector.load %arg7[%c0_44, %c0_45, %c0_46] : memref<1x1x32xf32, #tpu.memory_space<vmem>>, vector<1x1x32xf32>
    %41 = vector.shape_cast %40 : vector<1x1x32xf32> to vector<1x32xf32>
    %c0_47 = arith.constant 0 : index
    %c0_48 = arith.constant 0 : index
    %c0_49 = arith.constant 0 : index
    %42 = vector.load %arg8[%c0_47, %c0_48, %c0_49] : memref<1x1x32xf32, #tpu.memory_space<vmem>>, vector<1x1x32xf32>
    %43 = vector.shape_cast %42 : vector<1x1x32xf32> to vector<1x32xf32>
    %c0_50 = arith.constant 0 : index
    %c0_51 = arith.constant 0 : index
    %c0_52 = arith.constant 0 : index
    %44 = vector.load %arg9[%c0_50, %c0_51, %c0_52] : memref<1x1x32xf32, #tpu.memory_space<vmem>>, vector<1x1x32xf32>
    %45 = vector.shape_cast %44 : vector<1x1x32xf32> to vector<1x32xf32>
    %c0_53 = arith.constant 0 : index
    %c0_54 = arith.constant 0 : index
    %c0_55 = arith.constant 0 : index
    %46 = vector.load %arg10[%c0_53, %c0_54, %c0_55] : memref<1x32x64xbf16, #tpu.memory_space<vmem>>, vector<1x32x64xbf16>
    %47 = vector.shape_cast %46 : vector<1x32x64xbf16> to vector<32x64xbf16>
    %c0_56 = arith.constant 0 : index
    %c0_57 = arith.constant 0 : index
    %c0_58 = arith.constant 0 : index
    %48 = vector.load %arg11[%c0_56, %c0_57, %c0_58] : memref<1x1x64xf32, #tpu.memory_space<vmem>>, vector<1x1x64xf32>
    %49 = vector.shape_cast %48 : vector<1x1x64xf32> to vector<1x64xf32>
    %c0_59 = arith.constant 0 : index
    %c0_60 = arith.constant 0 : index
    %c0_61 = arith.constant 0 : index
    %50 = vector.load %arg12[%c0_59, %c0_60, %c0_61] : memref<1x64x32xbf16, #tpu.memory_space<vmem>>, vector<1x64x32xbf16>
    %51 = vector.shape_cast %50 : vector<1x64x32xbf16> to vector<64x32xbf16>
    %c0_62 = arith.constant 0 : index
    %c0_63 = arith.constant 0 : index
    %c0_64 = arith.constant 0 : index
    %52 = vector.load %arg13[%c0_62, %c0_63, %c0_64] : memref<1x1x32xf32, #tpu.memory_space<vmem>>, vector<1x1x32xf32>
    %53 = vector.shape_cast %52 : vector<1x1x32xf32> to vector<1x32xf32>
    %c0_65 = arith.constant 0 : index
    %c0_66 = arith.constant 0 : index
    %c0_67 = arith.constant 0 : index
    %54 = vector.load %arg14[%c0_65, %c0_66, %c0_67] : memref<1x1x32xf32, #tpu.memory_space<vmem>>, vector<1x1x32xf32>
    %55 = vector.shape_cast %54 : vector<1x1x32xf32> to vector<1x32xf32>
    %c0_68 = arith.constant 0 : index
    %c0_69 = arith.constant 0 : index
    %c0_70 = arith.constant 0 : index
    %56 = vector.load %arg15[%c0_68, %c0_69, %c0_70] : memref<1x1x32xf32, #tpu.memory_space<vmem>>, vector<1x1x32xf32>
    %57 = vector.shape_cast %56 : vector<1x1x32xf32> to vector<1x32xf32>
    %cst_71 = arith.constant dense<0.000000e+00> : vector<8x32xf32>
    %58 = tpu.matmul %8, %11, %cst_71 {dimension_numbers = #tpu.dot_dimension_numbers<[1], [0], [0], [1], [0, 0, 1, 1], [], []>} : vector<8x32xbf16>, vector<32x32xbf16>, vector<8x32xf32> -> vector<8x32xf32>
    %59 = vector.broadcast %17 : vector<1x32xf32> to vector<8x32xf32>
    %60 = arith.addf %58, %59 : vector<8x32xf32>
    %cst_72 = arith.constant 0.353553385 : f32
    %61 = vector.broadcast %cst_72 : f32 to vector<8x32xf32>
    %62 = arith.mulf %60, %61 : vector<8x32xf32>
    %63 = arith.truncf %62 : vector<8x32xf32> to vector<8x32xbf16>
    %64 = vector.shape_cast %63 : vector<8x32xbf16> to vector<8x4x8xbf16>
    %65 = tpu.transpose %64, [1, 0, 2] : vector<8x4x8xbf16> -> vector<4x8x8xbf16>
    "tpu.trace_start"() <{level = 10 : i32, message = "hqd,hkd->hqk"}> : () -> ()
    %cst_73 = arith.constant dense<0.000000e+00> : vector<4x8x8xf32>
    %66 = tpu.matmul %65, %36, %cst_73 {dimension_numbers = #tpu.dot_dimension_numbers<[2], [2], [1], [1], [0, 0, 0, 1, 1, 1], [0], [0]>} : vector<4x8x8xbf16>, vector<4x8x8xbf16>, vector<4x8x8xf32> -> vector<4x8x8xf32>
    "tpu.trace_stop"() : () -> ()
    %cst_74 = arith.constant dense<0xFF800000> : vector<4x8xf32>
    %67 = vector.multi_reduction <maximumf>, %66, %cst_74 [2] : vector<4x8x8xf32> to vector<4x8xf32>
    %68 = vector.shape_cast %67 : vector<4x8xf32> to vector<4x8x1xf32>
    %69 = vector.broadcast %68 : vector<4x8x1xf32> to vector<4x8x8xf32>
    %70 = arith.subf %66, %69 : vector<4x8x8xf32>
    %71 = math.exp %70 : vector<4x8x8xf32>
    %cst_75 = arith.constant dense<0.000000e+00> : vector<4x8xf32>
    %72 = vector.multi_reduction <add>, %71, %cst_75 [2] : vector<4x8x8xf32> to vector<4x8xf32>
    %73 = vector.shape_cast %72 : vector<4x8xf32> to vector<4x8x1xf32>
    %74 = arith.truncf %71 : vector<4x8x8xf32> to vector<4x8x8xbf16>
    "tpu.trace_start"() <{level = 10 : i32, message = "hqk,hkd->hqd"}> : () -> ()
    %cst_76 = arith.constant dense<0.000000e+00> : vector<4x8x8xf32>
    %75 = tpu.matmul %74, %37, %cst_76 {dimension_numbers = #tpu.dot_dimension_numbers<[2], [1], [1], [2], [0, 0, 0, 1, 1, 2], [0], [0]>} : vector<4x8x8xbf16>, vector<4x8x8xbf16>, vector<4x8x8xf32> -> vector<4x8x8xf32>
    "tpu.trace_stop"() : () -> ()
    %76 = tpu.reciprocal %73 {approx = true} : vector<4x8x1xf32> -> vector<4x8x1xf32>
    %77 = vector.broadcast %76 : vector<4x8x1xf32> to vector<4x8x8xf32>
    %78 = arith.mulf %75, %77 : vector<4x8x8xf32>
    %79 = arith.truncf %78 : vector<4x8x8xf32> to vector<4x8x8xbf16>
    "tpu.trace_start"() <{level = 10 : i32, message = "hqd,hdo->hqo"}> : () -> ()
    %cst_77 = arith.constant dense<0.000000e+00> : vector<4x8x32xf32>
    %80 = tpu.matmul %79, %39, %cst_77 {dimension_numbers = #tpu.dot_dimension_numbers<[2], [1], [1], [2], [0, 0, 0, 1, 1, 2], [0], [0]>} : vector<4x8x8xbf16>, vector<4x8x32xbf16>, vector<4x8x32xf32> -> vector<4x8x32xf32>
    "tpu.trace_stop"() : () -> ()
    %cst_78 = arith.constant dense<0.000000e+00> : vector<8x32xf32>
    %81 = vector.multi_reduction <add>, %80, %cst_78 [0] : vector<4x8x32xf32> to vector<8x32xf32>
    %82 = vector.broadcast %41 : vector<1x32xf32> to vector<8x32xf32>
    %83 = arith.addf %81, %82 : vector<8x32xf32>
    %84 = arith.addf %3, %83 : vector<8x32xf32>
    %cst_79 = arith.constant dense<0.000000e+00> : vector<8xf32>
    %85 = vector.multi_reduction <add>, %84, %cst_79 [1] : vector<8x32xf32> to vector<8xf32>
    %86 = vector.shape_cast %85 : vector<8xf32> to vector<8x1xf32>
    %cst_80 = arith.constant 3.200000e+01 : f32
    %87 = vector.broadcast %cst_80 : f32 to vector<8x1xf32>
    %88 = arith.divf %86, %87 : vector<8x1xf32>
    %89 = vector.broadcast %88 : vector<8x1xf32> to vector<8x32xf32>
    %90 = arith.subf %84, %89 : vector<8x32xf32>
    %91 = arith.mulf %90, %90 : vector<8x32xf32>
    %cst_81 = arith.constant dense<0.000000e+00> : vector<8xf32>
    %92 = vector.multi_reduction <add>, %91, %cst_81 [1] : vector<8x32xf32> to vector<8xf32>
    %93 = vector.shape_cast %92 : vector<8xf32> to vector<8x1xf32>
    %cst_82 = arith.constant 3.200000e+01 : f32
    %94 = vector.broadcast %cst_82 : f32 to vector<8x1xf32>
    %95 = arith.divf %93, %94 : vector<8x1xf32>
    %96 = vector.broadcast %88 : vector<8x1xf32> to vector<8x32xf32>
    %97 = arith.subf %84, %96 : vector<8x32xf32>
    %cst_83 = arith.constant 9.99999974E-6 : f32
    %98 = vector.broadcast %cst_83 : f32 to vector<8x1xf32>
    %99 = arith.addf %95, %98 : vector<8x1xf32>
    %100 = math.rsqrt %99 : vector<8x1xf32>
    %101 = vector.broadcast %100 : vector<8x1xf32> to vector<8x32xf32>
    %102 = arith.mulf %97, %101 : vector<8x32xf32>
    %103 = vector.broadcast %43 : vector<1x32xf32> to vector<8x32xf32>
    %104 = arith.mulf %102, %103 : vector<8x32xf32>
    %105 = vector.broadcast %45 : vector<1x32xf32> to vector<8x32xf32>
    %106 = arith.addf %104, %105 : vector<8x32xf32>
    %107 = arith.truncf %106 : vector<8x32xf32> to vector<8x32xbf16>
    %cst_84 = arith.constant dense<0.000000e+00> : vector<8x64xf32>
    %108 = tpu.matmul %107, %47, %cst_84 {dimension_numbers = #tpu.dot_dimension_numbers<[1], [0], [0], [1], [0, 0, 1, 1], [], []>} : vector<8x32xbf16>, vector<32x64xbf16>, vector<8x64xf32> -> vector<8x64xf32>
    %109 = vector.broadcast %49 : vector<1x64xf32> to vector<8x64xf32>
    %110 = arith.addf %108, %109 : vector<8x64xf32>
    %cst_85 = arith.constant 0.000000e+00 : f32
    %111 = vector.broadcast %cst_85 : f32 to vector<8x64xf32>
    %112 = arith.maximumf %110, %111 : vector<8x64xf32>
    %113 = arith.truncf %112 : vector<8x64xf32> to vector<8x64xbf16>
    %cst_86 = arith.constant dense<0.000000e+00> : vector<8x32xf32>
    %114 = tpu.matmul %113, %51, %cst_86 {dimension_numbers = #tpu.dot_dimension_numbers<[1], [0], [0], [1], [0, 0, 1, 1], [], []>} : vector<8x64xbf16>, vector<64x32xbf16>, vector<8x32xf32> -> vector<8x32xf32>
    %115 = vector.broadcast %53 : vector<1x32xf32> to vector<8x32xf32>
    %116 = arith.addf %114, %115 : vector<8x32xf32>
    %117 = arith.addf %106, %116 : vector<8x32xf32>
    %cst_87 = arith.constant dense<0.000000e+00> : vector<8xf32>
    %118 = vector.multi_reduction <add>, %117, %cst_87 [1] : vector<8x32xf32> to vector<8xf32>
    %119 = vector.shape_cast %118 : vector<8xf32> to vector<8x1xf32>
    %cst_88 = arith.constant 3.200000e+01 : f32
    %120 = vector.broadcast %cst_88 : f32 to vector<8x1xf32>
    %121 = arith.divf %119, %120 : vector<8x1xf32>
    %122 = vector.broadcast %121 : vector<8x1xf32> to vector<8x32xf32>
    %123 = arith.subf %117, %122 : vector<8x32xf32>
    %124 = arith.mulf %123, %123 : vector<8x32xf32>
    %cst_89 = arith.constant dense<0.000000e+00> : vector<8xf32>
    %125 = vector.multi_reduction <add>, %124, %cst_89 [1] : vector<8x32xf32> to vector<8xf32>
    %126 = vector.shape_cast %125 : vector<8xf32> to vector<8x1xf32>
    %cst_90 = arith.constant 3.200000e+01 : f32
    %127 = vector.broadcast %cst_90 : f32 to vector<8x1xf32>
    %128 = arith.divf %126, %127 : vector<8x1xf32>
    %129 = vector.broadcast %121 : vector<8x1xf32> to vector<8x32xf32>
    %130 = arith.subf %117, %129 : vector<8x32xf32>
    %cst_91 = arith.constant 9.99999974E-6 : f32
    %131 = vector.broadcast %cst_91 : f32 to vector<8x1xf32>
    %132 = arith.addf %128, %131 : vector<8x1xf32>
    %133 = math.rsqrt %132 : vector<8x1xf32>
    %134 = vector.broadcast %133 : vector<8x1xf32> to vector<8x32xf32>
    %135 = arith.mulf %130, %134 : vector<8x32xf32>
    %136 = vector.broadcast %55 : vector<1x32xf32> to vector<8x32xf32>
    %137 = arith.mulf %135, %136 : vector<8x32xf32>
    %138 = vector.broadcast %57 : vector<1x32xf32> to vector<8x32xf32>
    %139 = arith.addf %137, %138 : vector<8x32xf32>
    %c0_92 = arith.constant 0 : index
    %c0_93 = arith.constant 0 : index
    %140 = vector.load %arg19[%c0_92, %c0_93] : memref<8x32xf32, #tpu.memory_space<vmem>>, vector<8x32xf32>
    tpu.vector_store %arg19[%c0_92, %c0_93], %139 {strides = array<i32>} : memref<8x32xf32, #tpu.memory_space<vmem>>, vector<8x32xf32>,
    %c1_i32 = arith.constant 1 : i32
    %141 = arith.cmpi eq, %arg1, %c1_i32 : i32
    %142 = arith.extui %141 : i1 to i32
    %c0_i32_94 = arith.constant 0 : i32
    %143 = arith.cmpi ne, %142, %c0_i32_94 : i32
    scf.if %143 {
      %c0_95 = arith.constant 0 : index
      %c0_96 = arith.constant 0 : index
      %144 = vector.load %arg19[%c0_95, %c0_96] : memref<8x32xf32, #tpu.memory_space<vmem>>, vector<8x32xf32>
      %c0_97 = arith.constant 0 : index
      %c0_98 = arith.constant 0 : index
      %145 = vector.load %arg16[%c0_97, %c0_98] : memref<1x32xf32, #tpu.memory_space<vmem>>, vector<1x32xf32>
      %c0_99 = arith.constant 0 : index
      %c0_100 = arith.constant 0 : index
      %146 = vector.load %arg17[%c0_99, %c0_100] : memref<1x32xf32, #tpu.memory_space<vmem>>, vector<1x32xf32>
      %cst_101 = arith.constant dense<0.000000e+00> : vector<8xf32>
      %147 = vector.multi_reduction <add>, %144, %cst_101 [1] : vector<8x32xf32> to vector<8xf32>
      %148 = vector.shape_cast %147 : vector<8xf32> to vector<8x1xf32>
      %cst_102 = arith.constant 3.200000e+01 : f32
      %149 = vector.broadcast %cst_102 : f32 to vector<8x1xf32>
      %150 = arith.divf %148, %149 : vector<8x1xf32>
      %151 = vector.broadcast %150 : vector<8x1xf32> to vector<8x32xf32>
      %152 = arith.subf %144, %151 : vector<8x32xf32>
      %153 = arith.mulf %152, %152 : vector<8x32xf32>
      %cst_103 = arith.constant dense<0.000000e+00> : vector<8xf32>
      %154 = vector.multi_reduction <add>, %153, %cst_103 [1] : vector<8x32xf32> to vector<8xf32>
      %155 = vector.shape_cast %154 : vector<8xf32> to vector<8x1xf32>
      %cst_104 = arith.constant 3.200000e+01 : f32
      %156 = vector.broadcast %cst_104 : f32 to vector<8x1xf32>
      %157 = arith.divf %155, %156 : vector<8x1xf32>
      %158 = vector.broadcast %150 : vector<8x1xf32> to vector<8x32xf32>
      %159 = arith.subf %144, %158 : vector<8x32xf32>
      %cst_105 = arith.constant 9.99999974E-6 : f32
      %160 = vector.broadcast %cst_105 : f32 to vector<8x1xf32>
      %161 = arith.addf %157, %160 : vector<8x1xf32>
      %162 = math.rsqrt %161 : vector<8x1xf32>
      %163 = vector.broadcast %162 : vector<8x1xf32> to vector<8x32xf32>
      %164 = arith.mulf %159, %163 : vector<8x32xf32>
      %165 = vector.broadcast %145 : vector<1x32xf32> to vector<8x32xf32>
      %166 = arith.mulf %164, %165 : vector<8x32xf32>
      %167 = vector.broadcast %146 : vector<1x32xf32> to vector<8x32xf32>
      %168 = arith.addf %166, %167 : vector<8x32xf32>
      %c0_106 = arith.constant 0 : index
      %c0_107 = arith.constant 0 : index
      %c0_108 = arith.constant 0 : index
      %169 = vector.load %arg18[%c0_106, %c0_107, %c0_108] : memref<1x8x32xf32, #tpu.memory_space<vmem>>, vector<1x8x32xf32>
      %170 = vector.shape_cast %169 : vector<1x8x32xf32> to vector<8x32xf32>
      %171 = vector.shape_cast %168 : vector<8x32xf32> to vector<1x8x32xf32>
      tpu.vector_store %arg18[%c0_106, %c0_107, %c0_108], %171 {strides = array<i32>} : memref<1x8x32xf32, #tpu.memory_space<vmem>>, vector<1x8x32xf32>,
    } else {
    }
    return
  }
  func.func @transform_0(%arg0: i32, %arg1: i32) -> (i32, i32, i32) {
    %c0_i32 = arith.constant 0 : i32
    %c0_i32_0 = arith.constant 0 : i32
    %c0_i32_1 = arith.constant 0 : i32
    return %arg0, %c0_i32, %c0_i32_0 : i32, i32, i32
  }
  func.func @transform_1(%arg0: i32, %arg1: i32) -> (i32, i32, i32) {
    %c0_i32 = arith.constant 0 : i32
    %c0_i32_0 = arith.constant 0 : i32
    %c0_i32_1 = arith.constant 0 : i32
    return %arg0, %c0_i32, %c0_i32_0 : i32, i32, i32
  }
  func.func @transform_2(%arg0: i32, %arg1: i32) -> (i32, i32, i32, i32) {
    %c0_i32 = arith.constant 0 : i32
    %c0_i32_0 = arith.constant 0 : i32
    %c0_i32_1 = arith.constant 0 : i32
    %c0_i32_2 = arith.constant 0 : i32
    return %arg1, %c0_i32, %c0_i32_0, %c0_i32_1 : i32, i32, i32, i32
  }
  func.func @transform_3(%arg0: i32, %arg1: i32) -> (i32, i32, i32, i32) {
    %c0_i32 = arith.constant 0 : i32
    %c0_i32_0 = arith.constant 0 : i32
    %c0_i32_1 = arith.constant 0 : i32
    %c0_i32_2 = arith.constant 0 : i32
    return %arg1, %c0_i32, %c0_i32_0, %c0_i32_1 : i32, i32, i32, i32
  }
  func.func @transform_4(%arg0: i32, %arg1: i32) -> (i32, i32, i32, i32) {
    %c0_i32 = arith.constant 0 : i32
    %c0_i32_0 = arith.constant 0 : i32
    %c0_i32_1 = arith.constant 0 : i32
    %c0_i32_2 = arith.constant 0 : i32
    return %arg1, %c0_i32, %c0_i32_0, %c0_i32_1 : i32, i32, i32, i32
  }
  func.func @transform_5(%arg0: i32, %arg1: i32) -> (i32, i32, i32) {
    %c0_i32 = arith.constant 0 : i32
    %c0_i32_0 = arith.constant 0 : i32
    %c0_i32_1 = arith.constant 0 : i32
    return %arg1, %c0_i32, %c0_i32_0 : i32, i32, i32
  }
  func.func @transform_6(%arg0: i32, %arg1: i32) -> (i32, i32, i32) {
    %c0_i32 = arith.constant 0 : i32
    %c0_i32_0 = arith.constant 0 : i32
    %c0_i32_1 = arith.constant 0 : i32
    return %arg1, %c0_i32, %c0_i32_0 : i32, i32, i32
  }
  func.func @transform_7(%arg0: i32, %arg1: i32) -> (i32, i32, i32) {
    %c0_i32 = arith.constant 0 : i32
    %c0_i32_0 = arith.constant 0 : i32
    %c0_i32_1 = arith.constant 0 : i32
    return %arg1, %c0_i32, %c0_i32_0 : i32, i32, i32
  }
  func.func @transform_8(%arg0: i32, %arg1: i32) -> (i32, i32, i32) {
    %c0_i32 = arith.constant 0 : i32
    %c0_i32_0 = arith.constant 0 : i32
    %c0_i32_1 = arith.constant 0 : i32
    return %arg1, %c0_i32, %c0_i32_0 : i32, i32, i32
  }
  func.func @transform_9(%arg0: i32, %arg1: i32) -> (i32, i32, i32) {
    %c0_i32 = arith.constant 0 : i32
    %c0_i32_0 = arith.constant 0 : i32
    %c0_i32_1 = arith.constant 0 : i32
    return %arg1, %c0_i32, %c0_i32_0 : i32, i32, i32
  }
  func.func @transform_10(%arg0: i32, %arg1: i32) -> (i32, i32, i32) {
    %c0_i32 = arith.constant 0 : i32
    %c0_i32_0 = arith.constant 0 : i32
    %c0_i32_1 = arith.constant 0 : i32
    return %arg1, %c0_i32, %c0_i32_0 : i32, i32, i32
  }
  func.func @transform_11(%arg0: i32, %arg1: i32) -> (i32, i32, i32) {
    %c0_i32 = arith.constant 0 : i32
    %c0_i32_0 = arith.constant 0 : i32
    %c0_i32_1 = arith.constant 0 : i32
    return %arg1, %c0_i32, %c0_i32_0 : i32, i32, i32
  }
  func.func @transform_12(%arg0: i32, %arg1: i32) -> (i32, i32, i32) {
    %c0_i32 = arith.constant 0 : i32
    %c0_i32_0 = arith.constant 0 : i32
    %c0_i32_1 = arith.constant 0 : i32
    return %arg1, %c0_i32, %c0_i32_0 : i32, i32, i32
  }
  func.func @transform_13(%arg0: i32, %arg1: i32) -> (i32, i32, i32) {
    %c0_i32 = arith.constant 0 : i32
    %c0_i32_0 = arith.constant 0 : i32
    %c0_i32_1 = arith.constant 0 : i32
    return %arg1, %c0_i32, %c0_i32_0 : i32, i32, i32
  }
  func.func @transform_14(%arg0: i32, %arg1: i32) -> (i32, i32) {
    %c0_i32 = arith.constant 0 : i32
    %c0_i32_0 = arith.constant 0 : i32
    %c0_i32_1 = arith.constant 0 : i32
    return %c0_i32, %c0_i32_0 : i32, i32
  }
  func.func @transform_15(%arg0: i32, %arg1: i32) -> (i32, i32) {
    %c0_i32 = arith.constant 0 : i32
    %c0_i32_0 = arith.constant 0 : i32
    %c0_i32_1 = arith.constant 0 : i32
    return %c0_i32, %c0_i32_0 : i32, i32
  }
  func.func @transform_16(%arg0: i32, %arg1: i32) -> (i32, i32, i32) {
    %c0_i32 = arith.constant 0 : i32
    %c0_i32_0 = arith.constant 0 : i32
    %c0_i32_1 = arith.constant 0 : i32
    return %arg0, %c0_i32, %c0_i32_0 : i32, i32, i32
  }
}

</mosaic_0001>

<llo_original>
// kernel: tpu_custom_call.1
$region0: #{tpu_custom_call.1}
  #allocation0 [shape = 'u32[]', space=smem, size = 0x4, offset = 0x4, fixed_abs, tag = 'smem constant byte address 0x4 - core index']
  #allocation1 [shape = 'u32[144,128]{1,0:T(1,128)}', space=vmem, size = 0x12000, scoped, tag = 'internal scratch']
  #allocation2 [shape = 'f32[8,32]{1,0:T(8,128)}', space=vmem, size = 0x1000, scoped, tag = 'scratch operand']
  #allocation3 [shape = 'bf16[4,8,8]{2,1,0:T(8,128)(2,1)}', space=vmem, size = 0x2000, scoped, tag = 'scratch operand']
  #allocation4 [shape = 'bf16[4,8,8]{2,1,0:T(8,128)(2,1)}', space=vmem, size = 0x2000, scoped, tag = 'scratch operand']
  %s0 = inlined_call_operand.hbm [shape: f32[2,8,32], index: 0, kind: input, shape index: {}]
  %s1 = inlined_call_operand.hbm [shape: bf16[2,8,32], index: 1, kind: input, shape index: {}]
  %s2 = inlined_call_operand.vmem [shape: bf16[2,3,32,32], index: 2, kind: input, shape index: {}]
  %s3 = inlined_call_operand.hbm [shape: f32[2,3,1,32], index: 3, kind: input, shape index: {}]
  %s4 = inlined_call_operand.hbm [shape: bf16[2,4,8,32], index: 4, kind: input, shape index: {}]
  %s5 = inlined_call_operand.vmem [shape: f32[2,1,32], index: 5, kind: input, shape index: {}]
  %s6 = inlined_call_operand.vmem [shape: f32[2,1,32], index: 6, kind: input, shape index: {}]
  %s7 = inlined_call_operand.vmem [shape: f32[2,1,32], index: 7, kind: input, shape index: {}]
  %s8 = inlined_call_operand.hbm [shape: bf16[2,32,64], index: 8, kind: input, shape index: {}]
  %s9 = inlined_call_operand.vmem [shape: f32[2,1,64], index: 9, kind: input, shape index: {}]
  %s10 = inlined_call_operand.vmem [shape: bf16[2,64,32], index: 10, kind: input, shape index: {}]
  %s11 = inlined_call_operand.vmem [shape: f32[2,1,32], index: 11, kind: input, shape index: {}]
  %s12 = inlined_call_operand.vmem [shape: f32[2,1,32], index: 12, kind: input, shape index: {}]
  %s13 = inlined_call_operand.vmem [shape: f32[2,1,32], index: 13, kind: input, shape index: {}]
  %s14 = inlined_call_operand.vmem [shape: f32[1,32], index: 14, kind: input, shape index: {}]
  %s15 = inlined_call_operand.vmem [shape: f32[1,32], index: 15, kind: input, shape index: {}]
  %s16 = inlined_call_operand.hbm [shape: f32[2,8,32], index: 16, kind: output, shape index: {}]
  %s17 = sld [smem:[#allocation0]]
  $region125: #{tpu_custom_call.1} parent=0
    _
  %s19 = ssub.s32 1, %s17
  %s20 = scalar_select 0, %s19, %s17
  $region1: #{tpu_custom_call.1} parent=0
    #allocation5 [shape = 'u8[8192]{0}', space=vmem, size = 0x2000, scoped, tag = 'input window, operand 0']
    #allocation6 [shape = 's32[2]{0}', space=sflag, size = 0x8, scoped, tag = 'scoped memory for tpu_custom_call.1']
    #allocation7 [shape = 's32[2]{0}', space=sflag, size = 0x8, scoped, tag = 'scoped memory for tpu_custom_call.1']
    #allocation8 [shape = 'u8[4096]{0}', space=vmem, size = 0x1000, scoped, tag = 'input window, operand 1']
    #allocation9 [shape = 's32[2]{0}', space=sflag, size = 0x8, scoped, tag = 'scoped memory for tpu_custom_call.1']
    #allocation10 [shape = 'u8[3072]{0}', space=vmem, size = 0xc00, scoped, tag = 'input window, operand 3']
    #allocation11 [shape = 'u8[16384]{0}', space=vmem, size = 0x4000, scoped, tag = 'input window, operand 4']
    #allocation12 [shape = 's32[2]{0}', space=sflag, size = 0x8, scoped, tag = 'scoped memory for tpu_custom_call.1']
    #allocation13 [shape = 'u8[16384]{0}', space=vmem, size = 0x4000, scoped, tag = 'input window, operand 8']
    #allocation14 [shape = 'u8[8192]{0}', space=vmem, size = 0x2000, scoped, tag = 'output window, operand 0']
    %21 = vsyncpa [#allocation6], 0
    %s22 = scalar_lea.sflag [#allocation6], 1
    %23 = vsyncpa %s22, 0
    %24 = vsyncpa [#allocation9], 0
    %s25 = scalar_lea.sflag [#allocation9], 1
    %26 = vsyncpa %s25, 0
    %27 = vsyncpa [#allocation12], 0
    %s28 = scalar_lea.sflag [#allocation12], 1
    %29 = vsyncpa %s28, 0
    %30 = vsyncpa [#allocation7], 0
    %s31 = scalar_lea.sflag [#allocation7], 1
    %32 = vsyncpa %s31, 0
    loop: start=0, step=1, limit=6
    $region2: #{tpu_custom_call.1} parent=1 // loop_pre_header
      _
    $region3: #{tpu_custom_call.1} parent=1 // loop_header
      %s34 = sphi 0, %s38
      %p35 = scmp.ge.s32.totalorder %s34, 6
      %s41 = sphi 0, %s53
      %s42 = sphi 0, %s49
      %s43 = sphi 0, %s41
      %s44 = sphi 0, %s42
      %s45 = sphi 0, %s43
      %s46 = sphi 0, %s44
      %s56 = sphi 0, %s58
      %s59 = sphi 0, %s56
      %s60 = sphi 0, %s59
      %s76 = sphi 0, %s60
      %s82 = sphi 0, %s84
      %s85 = sphi 0, %s82
      %s86 = sphi 0, %s85
      %s102 = sphi 0, %s86
      %s108 = sphi 0, %s110
      %s111 = sphi 0, %s108
      %s112 = sphi 0, %s111
      %s128 = sphi 0, %s112
      %s134 = sphi 0, %s136
      %s137 = sphi 0, %s134
      %s138 = sphi 0, %s137
      %s154 = sphi 0, %s138
      %s160 = sphi 0, %s162
      %s163 = sphi 0, %s160
      %s164 = sphi 0, %s163
      %s180 = sphi 0, %s164
      %s186 = sphi 0, %s188
      %s189 = sphi 0, %s186
      %s190 = sphi 0, %s189
      %s206 = sphi 0, %s190
      %s212 = sphi 0, %s214
      %s215 = sphi 0, %s212
      %s216 = sphi 0, %s215
      %s232 = sphi 0, %s216
      %s238 = sphi 0, %s240
      %s241 = sphi 0, %s238
      %s242 = sphi 0, %s241
      %s258 = sphi 0, %s242
      %s264 = sphi 0, %s266
      %s267 = sphi 0, %s264
      %s268 = sphi 0, %s267
      %s284 = sphi 0, %s268
      %s290 = sphi 0, %s292
      %s293 = sphi 0, %s290
      %s294 = sphi 0, %s293
      %s310 = sphi 0, %s294
      %s316 = sphi 0, %s318
      %s319 = sphi 0, %s316
      %s320 = sphi 0, %s319
      %s336 = sphi 0, %s320
      %s342 = sphi 0, %s344
      %s345 = sphi 0, %s342
      %s346 = sphi 0, %s345
      %s362 = sphi 0, %s346
      %s368 = sphi 0, %s370
      %s371 = sphi 0, %s368
      %s372 = sphi 0, %s371
      %s388 = sphi 0, %s372
      %s394 = sphi 0, %s396
      %s397 = sphi 0, %s394
      %s398 = sphi 0, %s397
      %s414 = sphi 0, %s398
      %s418 = sphi 0, %s418
      %s420 = sphi 0, %s418
      %s421 = sphi 0, %s420
      %s435 = sphi 0, %s421
      %s439 = sphi 0, %s439
      %s441 = sphi 0, %s439
      %s442 = sphi 0, %s441
      %s456 = sphi 0, %s442
      %s462 = sphi 0, %s464
      %s465 = sphi 0, %s462
      %s466 = sphi 0, %s465
      %s482 = sphi 0, %s466
    $region4: #{tpu_custom_call.1} parent=1 // loop_header_branch
      %37 = sbr.rel (%p35) target = $region8
    $region5: #{tpu_custom_call.1} parent=1 // loop_body
      %s39 = ssub.s32 %s34, 1
      %s40 = ssub.s32 %s34, 2
      %s47 = sadd.s32 1, %s42
      %p48 = scmp.ge.s32.totalorder %s47, 2
      %s49 = scalar_select %p48, 0, %s47
      %s50 = sadd.s32 1, %s41
      %s51 = scalar_select %p48, %s50, %s41
      %p52 = scmp.ge.s32.totalorder %s51, 2
      %s53 = scalar_select %p52, 0, %s51
      %s54 = ssub.s32 %s41, %s53
      %p55 = scmp.eq.s32.totalorder %s54, 0
      %s57 = sadd.s32 %s56, 1
      %s58 = scalar_select %p55, %s56, %s57
      %p61 = pneg %p55
      %p62 = scmp.eq.s32.totalorder %s34, 3
      %p63 = por %p61, %p62
      %p64 = scmp.ne.s32.totalorder %s56, %s59
      %p65 = scmp.eq.s32.totalorder %s34, 0
      %p66 = por %p64, %p65
      %p67 = scmp.ne.s32.totalorder %s56, %s59
      %p68 = scmp.eq.s32.totalorder %s39, 3
      %p69 = por %p67, %p68
      %p70 = scmp.ne.s32.totalorder %s59, %s60
      %p71 = scmp.eq.s32.totalorder %s39, 0
      %p72 = por %p70, %p71
      %p73 = scmp.ne.s32.totalorder %s59, %s60
      %p74 = scmp.eq.s32.totalorder %s40, 3
      %p75 = por %p73, %p74
      %p77 = scmp.ne.s32.totalorder %s60, %s76
      %p78 = scmp.eq.s32.totalorder %s40, 0
      %p79 = por %p77, %p78
      %s80 = ssub.s32 %s41, %s53
      %p81 = scmp.eq.s32.totalorder %s80, 0
      %s83 = sadd.s32 %s82, 1
      %s84 = scalar_select %p81, %s82, %s83
      %p87 = pneg %p81
      %p88 = scmp.eq.s32.totalorder %s34, 3
      %p89 = por %p87, %p88
      %p90 = scmp.ne.s32.totalorder %s82, %s85
      %p91 = scmp.eq.s32.totalorder %s34, 0
      %p92 = por %p90, %p91
      %p93 = scmp.ne.s32.totalorder %s82, %s85
      %p94 = scmp.eq.s32.totalorder %s39, 3
      %p95 = por %p93, %p94
      %p96 = scmp.ne.s32.totalorder %s85, %s86
      %p97 = scmp.eq.s32.totalorder %s39, 0
      %p98 = por %p96, %p97
      %p99 = scmp.ne.s32.totalorder %s85, %s86
      %p100 = scmp.eq.s32.totalorder %s40, 3
      %p101 = por %p99, %p100
      %p103 = scmp.ne.s32.totalorder %s86, %s102
      %p104 = scmp.eq.s32.totalorder %s40, 0
      %p105 = por %p103, %p104
      %s106 = ssub.s32 %s42, %s49
      %p107 = scmp.eq.s32.totalorder %s106, 0
      %s109 = sadd.s32 %s108, 1
      %s110 = scalar_select %p107, %s108, %s109
      %p113 = pneg %p107
      %p114 = scmp.eq.s32.totalorder %s34, 3
      %p115 = por %p113, %p114
      %p116 = scmp.ne.s32.totalorder %s108, %s111
      %p117 = scmp.eq.s32.totalorder %s34, 0
      %p118 = por %p116, %p117
      %p119 = scmp.ne.s32.totalorder %s108, %s111
      %p120 = scmp.eq.s32.totalorder %s39, 3
      %p121 = por %p119, %p120
      %p122 = scmp.ne.s32.totalorder %s111, %s112
      %p123 = scmp.eq.s32.totalorder %s39, 0
      %p124 = por %p122, %p123
      %p125 = scmp.ne.s32.totalorder %s111, %s112
      %p126 = scmp.eq.s32.totalorder %s40, 3
      %p127 = por %p125, %p126
      %p129 = scmp.ne.s32.totalorder %s112, %s128
      %p130 = scmp.eq.s32.totalorder %s40, 0
      %p131 = por %p129, %p130
      %s132 = ssub.s32 %s42, %s49
      %p133 = scmp.eq.s32.totalorder %s132, 0
      %s135 = sadd.s32 %s134, 1
      %s136 = scalar_select %p133, %s134, %s135
      %p139 = pneg %p133
      %p140 = scmp.eq.s32.totalorder %s34, 3
      %p141 = por %p139, %p140
      %p142 = scmp.ne.s32.totalorder %s134, %s137
      %p143 = scmp.eq.s32.totalorder %s34, 0
      %p144 = por %p142, %p143
      %p145 = scmp.ne.s32.totalorder %s134, %s137
      %p146 = scmp.eq.s32.totalorder %s39, 3
      %p147 = por %p145, %p146
      %p148 = scmp.ne.s32.totalorder %s137, %s138
      %p149 = scmp.eq.s32.totalorder %s39, 0
      %p150 = por %p148, %p149
      %p151 = scmp.ne.s32.totalorder %s137, %s138
      %p152 = scmp.eq.s32.totalorder %s40, 3
      %p153 = por %p151, %p152
      %p155 = scmp.ne.s32.totalorder %s138, %s154
      %p156 = scmp.eq.s32.totalorder %s40, 0
      %p157 = por %p155, %p156
      %s158 = ssub.s32 %s42, %s49
      %p159 = scmp.eq.s32.totalorder %s158, 0
      %s161 = sadd.s32 %s160, 1
      %s162 = scalar_select %p159, %s160, %s161
      %p165 = pneg %p159
      %p166 = scmp.eq.s32.totalorder %s34, 3
      %p167 = por %p165, %p166
      %p168 = scmp.ne.s32.totalorder %s160, %s163
      %p169 = scmp.eq.s32.totalorder %s34, 0
      %p170 = por %p168, %p169
      %p171 = scmp.ne.s32.totalorder %s160, %s163
      %p172 = scmp.eq.s32.totalorder %s39, 3
      %p173 = por %p171, %p172
      %p174 = scmp.ne.s32.totalorder %s163, %s164
      %p175 = scmp.eq.s32.totalorder %s39, 0
      %p176 = por %p174, %p175
      %p177 = scmp.ne.s32.totalorder %s163, %s164
      %p178 = scmp.eq.s32.totalorder %s40, 3
      %p179 = por %p177, %p178
      %p181 = scmp.ne.s32.totalorder %s164, %s180
      %p182 = scmp.eq.s32.totalorder %s40, 0
      %p183 = por %p181, %p182
      %s184 = ssub.s32 %s42, %s49
      %p185 = scmp.eq.s32.totalorder %s184, 0
      %s187 = sadd.s32 %s186, 1
      %s188 = scalar_select %p185, %s186, %s187
      %p191 = pneg %p185
      %p192 = scmp.eq.s32.totalorder %s34, 3
      %p193 = por %p191, %p192
      %p194 = scmp.ne.s32.totalorder %s186, %s189
      %p195 = scmp.eq.s32.totalorder %s34, 0
      %p196 = por %p194, %p195
      %p197 = scmp.ne.s32.totalorder %s186, %s189
      %p198 = scmp.eq.s32.totalorder %s39, 3
      %p199 = por %p197, %p198
      %p200 = scmp.ne.s32.totalorder %s189, %s190
      %p201 = scmp.eq.s32.totalorder %s39, 0
      %p202 = por %p200, %p201
      %p203 = scmp.ne.s32.totalorder %s189, %s190
      %p204 = scmp.eq.s32.totalorder %s40, 3
      %p205 = por %p203, %p204
      %p207 = scmp.ne.s32.totalorder %s190, %s206
      %p208 = scmp.eq.s32.totalorder %s40, 0
      %p209 = por %p207, %p208
      %s210 = ssub.s32 %s42, %s49
      %p211 = scmp.eq.s32.totalorder %s210, 0
      %s213 = sadd.s32 %s212, 1
      %s214 = scalar_select %p211, %s212, %s213
      %p217 = pneg %p211
      %p218 = scmp.eq.s32.totalorder %s34, 3
      %p219 = por %p217, %p218
      %p220 = scmp.ne.s32.totalorder %s212, %s215
      %p221 = scmp.eq.s32.totalorder %s34, 0
      %p222 = por %p220, %p221
      %p223 = scmp.ne.s32.totalorder %s212, %s215
      %p224 = scmp.eq.s32.totalorder %s39, 3
      %p225 = por %p223, %p224
      %p226 = scmp.ne.s32.totalorder %s215, %s216
      %p227 = scmp.eq.s32.totalorder %s39, 0
      %p228 = por %p226, %p227
      %p229 = scmp.ne.s32.totalorder %s215, %s216
      %p230 = scmp.eq.s32.totalorder %s40, 3
      %p231 = por %p229, %p230
      %p233 = scmp.ne.s32.totalorder %s216, %s232
      %p234 = scmp.eq.s32.totalorder %s40, 0
      %p235 = por %p233, %p234
      %s236 = ssub.s32 %s42, %s49
      %p237 = scmp.eq.s32.totalorder %s236, 0
      %s239 = sadd.s32 %s238, 1
      %s240 = scalar_select %p237, %s238, %s239
      %p243 = pneg %p237
      %p244 = scmp.eq.s32.totalorder %s34, 3
      %p245 = por %p243, %p244
      %p246 = scmp.ne.s32.totalorder %s238, %s241
      %p247 = scmp.eq.s32.totalorder %s34, 0
      %p248 = por %p246, %p247
      %p249 = scmp.ne.s32.totalorder %s238, %s241
      %p250 = scmp.eq.s32.totalorder %s39, 3
      %p251 = por %p249, %p250
      %p252 = scmp.ne.s32.totalorder %s241, %s242
      %p253 = scmp.eq.s32.totalorder %s39, 0
      %p254 = por %p252, %p253
      %p255 = scmp.ne.s32.totalorder %s241, %s242
      %p256 = scmp.eq.s32.totalorder %s40, 3
      %p257 = por %p255, %p256
      %p259 = scmp.ne.s32.totalorder %s242, %s258
      %p260 = scmp.eq.s32.totalorder %s40, 0
      %p261 = por %p259, %p260
      %s262 = ssub.s32 %s42, %s49
      %p263 = scmp.eq.s32.totalorder %s262, 0
      %s265 = sadd.s32 %s264, 1
      %s266 = scalar_select %p263, %s264, %s265
      %p269 = pneg %p263
      %p270 = scmp.eq.s32.totalorder %s34, 3
      %p271 = por %p269, %p270
      %p272 = scmp.ne.s32.totalorder %s264, %s267
      %p273 = scmp.eq.s32.totalorder %s34, 0
      %p274 = por %p272, %p273
      %p275 = scmp.ne.s32.totalorder %s264, %s267
      %p276 = scmp.eq.s32.totalorder %s39, 3
      %p277 = por %p275, %p276
      %p278 = scmp.ne.s32.totalorder %s267, %s268
      %p279 = scmp.eq.s32.totalorder %s39, 0
      %p280 = por %p278, %p279
      %p281 = scmp.ne.s32.totalorder %s267, %s268
      %p282 = scmp.eq.s32.totalorder %s40, 3
      %p283 = por %p281, %p282
      %p285 = scmp.ne.s32.totalorder %s268, %s284
      %p286 = scmp.eq.s32.totalorder %s40, 0
      %p287 = por %p285, %p286
      %s288 = ssub.s32 %s42, %s49
      %p289 = scmp.eq.s32.totalorder %s288, 0
      %s291 = sadd.s32 %s290, 1
      %s292 = scalar_select %p289, %s290, %s291
      %p295 = pneg %p289
      %p296 = scmp.eq.s32.totalorder %s34, 3
      %p297 = por %p295, %p296
      %p298 = scmp.ne.s32.totalorder %s290, %s293
      %p299 = scmp.eq.s32.totalorder %s34, 0
      %p300 = por %p298, %p299
      %p301 = scmp.ne.s32.totalorder %s290, %s293
      %p302 = scmp.eq.s32.totalorder %s39, 3
      %p303 = por %p301, %p302
      %p304 = scmp.ne.s32.totalorder %s293, %s294
      %p305 = scmp.eq.s32.totalorder %s39, 0
      %p306 = por %p304, %p305
      %p307 = scmp.ne.s32.totalorder %s293, %s294
      %p308 = scmp.eq.s32.totalorder %s40, 3
      %p309 = por %p307, %p308
      %p311 = scmp.ne.s32.totalorder %s294, %s310
      %p312 = scmp.eq.s32.totalorder %s40, 0
      %p313 = por %p311, %p312
      %s314 = ssub.s32 %s42, %s49
      %p315 = scmp.eq.s32.totalorder %s314, 0
      %s317 = sadd.s32 %s316, 1
      %s318 = scalar_select %p315, %s316, %s317
      %p321 = pneg %p315
      %p322 = scmp.eq.s32.totalorder %s34, 3
      %p323 = por %p321, %p322
      %p324 = scmp.ne.s32.totalorder %s316, %s319
      %p325 = scmp.eq.s32.totalorder %s34, 0
      %p326 = por %p324, %p325
      %p327 = scmp.ne.s32.totalorder %s316, %s319
      %p328 = scmp.eq.s32.totalorder %s39, 3
      %p329 = por %p327, %p328
      %p330 = scmp.ne.s32.totalorder %s319, %s320
      %p331 = scmp.eq.s32.totalorder %s39, 0
      %p332 = por %p330, %p331
      %p333 = scmp.ne.s32.totalorder %s319, %s320
      %p334 = scmp.eq.s32.totalorder %s40, 3
      %p335 = por %p333, %p334
      %p337 = scmp.ne.s32.totalorder %s320, %s336
      %p338 = scmp.eq.s32.totalorder %s40, 0
      %p339 = por %p337, %p338
      %s340 = ssub.s32 %s42, %s49
      %p341 = scmp.eq.s32.totalorder %s340, 0
      %s343 = sadd.s32 %s342, 1
      %s344 = scalar_select %p341, %s342, %s343
      %p347 = pneg %p341
      %p348 = scmp.eq.s32.totalorder %s34, 3
      %p349 = por %p347, %p348
      %p350 = scmp.ne.s32.totalorder %s342, %s345
      %p351 = scmp.eq.s32.totalorder %s34, 0
      %p352 = por %p350, %p351
      %p353 = scmp.ne.s32.totalorder %s342, %s345
      %p354 = scmp.eq.s32.totalorder %s39, 3
      %p355 = por %p353, %p354
      %p356 = scmp.ne.s32.totalorder %s345, %s346
      %p357 = scmp.eq.s32.totalorder %s39, 0
      %p358 = por %p356, %p357
      %p359 = scmp.ne.s32.totalorder %s345, %s346
      %p360 = scmp.eq.s32.totalorder %s40, 3
      %p361 = por %p359, %p360
      %p363 = scmp.ne.s32.totalorder %s346, %s362
      %p364 = scmp.eq.s32.totalorder %s40, 0
      %p365 = por %p363, %p364
      %s366 = ssub.s32 %s42, %s49
      %p367 = scmp.eq.s32.totalorder %s366, 0
      %s369 = sadd.s32 %s368, 1
      %s370 = scalar_select %p367, %s368, %s369
      %p373 = pneg %p367
      %p374 = scmp.eq.s32.totalorder %s34, 3
      %p375 = por %p373, %p374
      %p376 = scmp.ne.s32.totalorder %s368, %s371
      %p377 = scmp.eq.s32.totalorder %s34, 0
      %p378 = por %p376, %p377
      %p379 = scmp.ne.s32.totalorder %s368, %s371
      %p380 = scmp.eq.s32.totalorder %s39, 3
      %p381 = por %p379, %p380
      %p382 = scmp.ne.s32.totalorder %s371, %s372
      %p383 = scmp.eq.s32.totalorder %s39, 0
      %p384 = por %p382, %p383
      %p385 = scmp.ne.s32.totalorder %s371, %s372
      %p386 = scmp.eq.s32.totalorder %s40, 3
      %p387 = por %p385, %p386
      %p389 = scmp.ne.s32.totalorder %s372, %s388
      %p390 = scmp.eq.s32.totalorder %s40, 0
      %p391 = por %p389, %p390
      %s392 = ssub.s32 %s42, %s49
      %p393 = scmp.eq.s32.totalorder %s392, 0
      %s395 = sadd.s32 %s394, 1
      %s396 = scalar_select %p393, %s394, %s395
      %p399 = pneg %p393
      %p400 = scmp.eq.s32.totalorder %s34, 3
      %p401 = por %p399, %p400
      %p402 = scmp.ne.s32.totalorder %s394, %s397
      %p403 = scmp.eq.s32.totalorder %s34, 0
      %p404 = por %p402, %p403
      %p405 = scmp.ne.s32.totalorder %s394, %s397
      %p406 = scmp.eq.s32.totalorder %s39, 3
      %p407 = por %p405, %p406
      %p408 = scmp.ne.s32.totalorder %s397, %s398
      %p409 = scmp.eq.s32.totalorder %s39, 0
      %p410 = por %p408, %p409
      %p411 = scmp.ne.s32.totalorder %s397, %s398
      %p412 = scmp.eq.s32.totalorder %s40, 3
      %p413 = por %p411, %p412
      %p415 = scmp.ne.s32.totalorder %s398, %s414
      %p416 = scmp.eq.s32.totalorder %s40, 0
      %p417 = por %p415, %p416
      %s419 = sadd.s32 %s418, 1
      %p422 = scmp.eq.s32.totalorder %s34, 3
      %p423 = scmp.ne.s32.totalorder %s418, %s420
      %p424 = scmp.eq.s32.totalorder %s34, 0
      %p425 = por %p423, %p424
      %p426 = scmp.ne.s32.totalorder %s418, %s420
      %p427 = scmp.eq.s32.totalorder %s39, 3
      %p428 = por %p426, %p427
      %p429 = scmp.ne.s32.totalorder %s420, %s421
      %p430 = scmp.eq.s32.totalorder %s39, 0
      %p431 = por %p429, %p430
      %p432 = scmp.ne.s32.totalorder %s420, %s421
      %p433 = scmp.eq.s32.totalorder %s40, 3
      %p434 = por %p432, %p433
      %p436 = scmp.ne.s32.totalorder %s421, %s435
      %p437 = scmp.eq.s32.totalorder %s40, 0
      %p438 = por %p436, %p437
      %s440 = sadd.s32 %s439, 1
      %p443 = scmp.eq.s32.totalorder %s34, 3
      %p444 = scmp.ne.s32.totalorder %s439, %s441
      %p445 = scmp.eq.s32.totalorder %s34, 0
      %p446 = por %p444, %p445
      %p447 = scmp.ne.s32.totalorder %s439, %s441
      %p448 = scmp.eq.s32.totalorder %s39, 3
      %p449 = por %p447, %p448
      %p450 = scmp.ne.s32.totalorder %s441, %s442
      %p451 = scmp.eq.s32.totalorder %s39, 0
      %p452 = por %p450, %p451
      %p453 = scmp.ne.s32.totalorder %s441, %s442
      %p454 = scmp.eq.s32.totalorder %s40, 3
      %p455 = por %p453, %p454
      %p457 = scmp.ne.s32.totalorder %s442, %s456
      %p458 = scmp.eq.s32.totalorder %s40, 0
      %p459 = por %p457, %p458
      %s460 = ssub.s32 %s41, %s53
      %p461 = scmp.eq.s32.totalorder %s460, 0
      %s463 = sadd.s32 %s462, 1
      %s464 = scalar_select %p461, %s462, %s463
      %p467 = pneg %p461
      %p468 = scmp.eq.s32.totalorder %s34, 3
      %p469 = por %p467, %p468
      %p470 = scmp.ne.s32.totalorder %s462, %s465
      %p471 = scmp.eq.s32.totalorder %s34, 0
      %p472 = por %p470, %p471
      %p473 = scmp.ne.s32.totalorder %s462, %s465
      %p474 = scmp.eq.s32.totalorder %s39, 3
      %p475 = por %p473, %p474
      %p476 = scmp.ne.s32.totalorder %s465, %s466
      %p477 = scmp.eq.s32.totalorder %s39, 0
      %p478 = por %p476, %p477
      %p479 = scmp.ne.s32.totalorder %s465, %s466
      %p480 = scmp.eq.s32.totalorder %s40, 3
      %p481 = por %p479, %p480
      %p483 = scmp.ne.s32.totalorder %s466, %s482
      %p484 = scmp.eq.s32.totalorder %s40, 0
      %p485 = por %p483, %p484
      %p486 = scmp.le.s32.totalorder 1, %s34
      %p487 = scmp.lt.s32.totalorder %s34, 5
      %p488 = pnand %p486, %p487
      %p489 = pneg %p488
      // Predicated region
      $region9: #{tpu_custom_call.1} parent=5 // pred_check
        _
      $region10: #{tpu_custom_call.1} parent=5 // pred_check_branch
        %491 = sbr.rel (%p488) target = $region12
      $region11: #{tpu_custom_call.1} parent=5 // pred_region
        %s492 = ssub.s32 %s34, 1
        // Predicated region
        $region13: #{tpu_custom_call.1} parent=11 // pred_check
          %p493 = pneg %p431
        $region14: #{tpu_custom_call.1} parent=11 // pred_check_branch
          %495 = sbr.rel (%p493) target = $region16
        $region15: #{tpu_custom_call.1} parent=11 // pred_region
          _
        $region16: #{tpu_custom_call.1} parent=11 // pred_fallthru
          _
        // Predicated region
        $region17: #{tpu_custom_call.1} parent=11 // pred_check
          %p496 = pneg %p452
        $region18: #{tpu_custom_call.1} parent=11 // pred_check_branch
          %498 = sbr.rel (%p496) target = $region20
        $region19: #{tpu_custom_call.1} parent=11 // pred_region
          _
        $region20: #{tpu_custom_call.1} parent=11 // pred_fallthru
          _
      $region12: #{tpu_custom_call.1} parent=5 // pred_fallthru
        _
      %p499 = scmp.lt.s32.totalorder %s34, 4
      // Predicated region
      $region21: #{tpu_custom_call.1} parent=5 // pred_check
        %p500 = pneg %p499
      $region22: #{tpu_custom_call.1} parent=5 // pred_check_branch
        %502 = sbr.rel (%p500) target = $region24
      $region23: #{tpu_custom_call.1} parent=5 // pred_region
        // Predicated region
        $region25: #{tpu_custom_call.1} parent=23 // pred_check
          %p503 = pneg %p66
        $region26: #{tpu_custom_call.1} parent=23 // pred_check_branch
          %505 = sbr.rel (%p503) target = $region28
        $region27: #{tpu_custom_call.1} parent=23 // pred_region
          %s506 = sand.u32 %s56, 1
          %s507 = scalar_lea.sflag [#allocation6], %s506
          %s508 = sand.u32 %s56, 1
          %s509 = smul.addr %s508, 8
          %s510 = scalar_lea.vmem [#allocation5], %s509
          %s512 = ssub.s32 128, 128
          %513 = vsyncadd %s507, %s512
          %s514 = smul.addr %s41, 128
          %s515 = scalar_lea.hbm %s0, %s514
          %s517 = sshll.u32 %s510, 4
          %s518 = int_to_ptr.vmem [resolvable:$true] %s517
          %520 = dma.hbm_to_vmem [thread:$0]  %s515, 128, %s518, %s507
        $region28: #{tpu_custom_call.1} parent=23 // pred_fallthru
          _
        // Predicated region
        $region29: #{tpu_custom_call.1} parent=23 // pred_check
          %p521 = pneg %p92
        $region30: #{tpu_custom_call.1} parent=23 // pred_check_branch
          %523 = sbr.rel (%p521) target = $region32
        $region31: #{tpu_custom_call.1} parent=23 // pred_region
          %s524 = sand.u32 %s34, 1
          %s525 = scalar_lea.sflag [#allocation9], %s524
          %s526 = sand.u32 %s82, 1
          %s527 = smul.addr %s526, 4
          %s528 = scalar_lea.vmem [#allocation8], %s527
          %s530 = ssub.s32 64, 64
          %531 = vsyncadd %s525, %s530
          %s532 = smul.addr %s41, 64
          %s533 = scalar_lea.hbm %s1, %s532
          %s535 = sshll.u32 %s528, 4
          %s536 = int_to_ptr.vmem [resolvable:$true] %s535
          %538 = dma.hbm_to_vmem [thread:$0]  %s533, 64, %s536, %s525
        $region32: #{tpu_custom_call.1} parent=23 // pred_fallthru
          _
        // Predicated region
        $region33: #{tpu_custom_call.1} parent=23 // pred_check
          %p539 = pneg %p118
        $region34: #{tpu_custom_call.1} parent=23 // pred_check_branch
          %541 = sbr.rel (%p539) target = $region36
        $region35: #{tpu_custom_call.1} parent=23 // pred_region
          %p542 = scmp.lt.s32.totalorder %s42, 1
          %s543 = scalar_select %p542, %s42, 1
          %s544 = smul.addr %s543, 12
          %s545 = smul.addr %s544, 4
          %s546 = scalar_lea.vmem %s2, %s545
        $region36: #{tpu_custom_call.1} parent=23 // pred_fallthru
          _
        // Predicated region
        $region37: #{tpu_custom_call.1} parent=23 // pred_check
          %p547 = pneg %p144
        $region38: #{tpu_custom_call.1} parent=23 // pred_check_branch
          %549 = sbr.rel (%p547) target = $region40
        $region39: #{tpu_custom_call.1} parent=23 // pred_region
          %s550 = sand.u32 %s34, 1
          %s551 = scalar_lea.sflag [#allocation9], %s550
          %s552 = sand.u32 %s134, 1
          %s553 = smul.addr %s552, 3
          %s554 = scalar_lea.vmem [#allocation10], %s553
          %s556 = ssub.s32 48, 48
          %557 = vsyncadd %s551, %s556
          %s558 = smul.addr %s42, 3
          %s559 = smul.addr %s558, 16
          %s560 = scalar_lea.hbm %s3, %s559
          %s561 = sshll.u32 %s554, 4
          %s562 = int_to_ptr.vmem [resolvable:$true] %s561
          %567 = dma.hbm_to_vmem [thread:$0]  %s560, 48, %s562, %s551, 16, 16, 1
        $region40: #{tpu_custom_call.1} parent=23 // pred_fallthru
          _
        // Predicated region
        $region41: #{tpu_custom_call.1} parent=23 // pred_check
          %p568 = pneg %p170
        $region42: #{tpu_custom_call.1} parent=23 // pred_check_branch
          %570 = sbr.rel (%p568) target = $region44
        $region43: #{tpu_custom_call.1} parent=23 // pred_region
          %s571 = sand.u32 %s34, 1
          %s572 = scalar_lea.sflag [#allocation12], %s571
          %s573 = sand.u32 %s160, 1
          %s574 = smul.addr %s573, 16
          %s575 = scalar_lea.vmem [#allocation11], %s574
          %s577 = ssub.s32 256, 256
          %578 = vsyncadd %s572, %s577
          %s579 = smul.addr %s42, 4
          %s580 = smul.addr %s579, 64
          %s581 = scalar_lea.hbm %s4, %s580
          %s582 = sshll.u32 %s575, 4
          %s583 = int_to_ptr.vmem [resolvable:$true] %s582
          %588 = dma.hbm_to_vmem [thread:$0]  %s581, 256, %s583, %s572, 64, 64, 4
        $region44: #{tpu_custom_call.1} parent=23 // pred_fallthru
          _
        // Predicated region
        $region45: #{tpu_custom_call.1} parent=23 // pred_check
          %p589 = pneg %p196
        $region46: #{tpu_custom_call.1} parent=23 // pred_check_branch
          %591 = sbr.rel (%p589) target = $region48
        $region47: #{tpu_custom_call.1} parent=23 // pred_region
          %p592 = scmp.lt.s32.totalorder %s42, 1
          %s593 = scalar_select %p592, %s42, 1
          %s594 = scalar_lea.vmem %s5, %s593
        $region48: #{tpu_custom_call.1} parent=23 // pred_fallthru
          _
        // Predicated region
        $region49: #{tpu_custom_call.1} parent=23 // pred_check
          %p595 = pneg %p222
        $region50: #{tpu_custom_call.1} parent=23 // pred_check_branch
          %597 = sbr.rel (%p595) target = $region52
        $region51: #{tpu_custom_call.1} parent=23 // pred_region
          %p598 = scmp.lt.s32.totalorder %s42, 1
          %s599 = scalar_select %p598, %s42, 1
          %s600 = scalar_lea.vmem %s6, %s599
        $region52: #{tpu_custom_call.1} parent=23 // pred_fallthru
          _
        // Predicated region
        $region53: #{tpu_custom_call.1} parent=23 // pred_check
          %p601 = pneg %p248
        $region54: #{tpu_custom_call.1} parent=23 // pred_check_branch
          %603 = sbr.rel (%p601) target = $region56
        $region55: #{tpu_custom_call.1} parent=23 // pred_region
          %p604 = scmp.lt.s32.totalorder %s42, 1
          %s605 = scalar_select %p604, %s42, 1
          %s606 = scalar_lea.vmem %s7, %s605
        $region56: #{tpu_custom_call.1} parent=23 // pred_fallthru
          _
        // Predicated region
        $region57: #{tpu_custom_call.1} parent=23 // pred_check
          %p607 = pneg %p274
        $region58: #{tpu_custom_call.1} parent=23 // pred_check_branch
          %609 = sbr.rel (%p607) target = $region60
        $region59: #{tpu_custom_call.1} parent=23 // pred_region
          %s610 = sand.u32 %s34, 1
          %s611 = scalar_lea.sflag [#allocation12], %s610
          %s612 = sand.u32 %s264, 1
          %s613 = smul.addr %s612, 16
          %s614 = scalar_lea.vmem [#allocation13], %s613
          %s616 = ssub.s32 256, 256
          %617 = vsyncadd %s611, %s616
          %s618 = smul.addr %s42, 4
          %s619 = smul.addr %s618, 64
          %s620 = scalar_lea.hbm %s8, %s619
          %s621 = sshll.u32 %s614, 4
          %s622 = int_to_ptr.vmem [resolvable:$true] %s621
          %627 = dma.hbm_to_vmem [thread:$0]  %s620, 256, %s622, %s611, 64, 64, 4
        $region60: #{tpu_custom_call.1} parent=23 // pred_fallthru
          _
        // Predicated region
        $region61: #{tpu_custom_call.1} parent=23 // pred_check
          %p628 = pneg %p300
        $region62: #{tpu_custom_call.1} parent=23 // pred_check_branch
          %630 = sbr.rel (%p628) target = $region64
        $region63: #{tpu_custom_call.1} parent=23 // pred_region
          %p631 = scmp.lt.s32.totalorder %s42, 1
          %s632 = scalar_select %p631, %s42, 1
          %s633 = scalar_lea.vmem %s9, %s632
        $region64: #{tpu_custom_call.1} parent=23 // pred_fallthru
          _
        // Predicated region
        $region65: #{tpu_custom_call.1} parent=23 // pred_check
          %p634 = pneg %p326
        $region66: #{tpu_custom_call.1} parent=23 // pred_check_branch
          %636 = sbr.rel (%p634) target = $region68
        $region67: #{tpu_custom_call.1} parent=23 // pred_region
          %p637 = scmp.lt.s32.totalorder %s42, 1
          %s638 = scalar_select %p637, %s42, 1
          %s639 = smul.addr %s638, 8
          %s640 = smul.addr %s639, 4
          %s641 = scalar_lea.vmem %s10, %s640
        $region68: #{tpu_custom_call.1} parent=23 // pred_fallthru
          _
        // Predicated region
        $region69: #{tpu_custom_call.1} parent=23 // pred_check
          %p642 = pneg %p352
        $region70: #{tpu_custom_call.1} parent=23 // pred_check_branch
          %644 = sbr.rel (%p642) target = $region72
        $region71: #{tpu_custom_call.1} parent=23 // pred_region
          %p645 = scmp.lt.s32.totalorder %s42, 1
          %s646 = scalar_select %p645, %s42, 1
          %s647 = scalar_lea.vmem %s11, %s646
        $region72: #{tpu_custom_call.1} parent=23 // pred_fallthru
          _
        // Predicated region
        $region73: #{tpu_custom_call.1} parent=23 // pred_check
          %p648 = pneg %p378
        $region74: #{tpu_custom_call.1} parent=23 // pred_check_branch
          %650 = sbr.rel (%p648) target = $region76
        $region75: #{tpu_custom_call.1} parent=23 // pred_region
          %p651 = scmp.lt.s32.totalorder %s42, 1
          %s652 = scalar_select %p651, %s42, 1
          %s653 = scalar_lea.vmem %s12, %s652
        $region76: #{tpu_custom_call.1} parent=23 // pred_fallthru
          _
        // Predicated region
        $region77: #{tpu_custom_call.1} parent=23 // pred_check
          %p654 = pneg %p404
        $region78: #{tpu_custom_call.1} parent=23 // pred_check_branch
          %656 = sbr.rel (%p654) target = $region80
        $region79: #{tpu_custom_call.1} parent=23 // pred_region
          %p657 = scmp.lt.s32.totalorder %s42, 1
          %s658 = scalar_select %p657, %s42, 1
          %s659 = scalar_lea.vmem %s13, %s658
        $region80: #{tpu_custom_call.1} parent=23 // pred_fallthru
          _
      $region24: #{tpu_custom_call.1} parent=5 // pred_fallthru
        _
      %p660 = scmp.le.s32.totalorder 1, %s34
      %p661 = scmp.lt.s32.totalorder %s34, 5
      %p662 = pnand %p660, %p661
      %p663 = pneg %p662
      // Predicated region
      $region81: #{tpu_custom_call.1} parent=5 // pred_check
        _
      $region82: #{tpu_custom_call.1} parent=5 // pred_check_branch
        %665 = sbr.rel (%p662) target = $region84
      $region83: #{tpu_custom_call.1} parent=5 // pred_region
        %s666 = ssub.s32 %s34, 1
        %s667 = sand.u32 %s59, 1
        %s668 = scalar_lea.sflag [#allocation6], %s667
        %s669 = sand.u32 %s59, 1
        %s670 = smul.addr %s669, 8
        %s671 = scalar_lea.vmem [#allocation5], %s670
        // Predicated region
        $region85: #{tpu_custom_call.1} parent=83 // pred_check
          %p672 = pneg %p72
        $region86: #{tpu_custom_call.1} parent=83 // pred_check_branch
          %674 = sbr.rel (%p672) target = $region88
        $region87: #{tpu_custom_call.1} parent=83 // pred_region
          %675 = dma.done %s668, 128
        $region88: #{tpu_custom_call.1} parent=83 // pred_fallthru
          _
        %s676 = sand.u32 %s39, 1
        %s677 = scalar_lea.sflag [#allocation9], %s676
        %s678 = sand.u32 %s85, 1
        %s679 = smul.addr %s678, 4
        %s680 = scalar_lea.vmem [#allocation8], %s679
        // Predicated region
        $region89: #{tpu_custom_call.1} parent=83 // pred_check
          %p681 = pneg %p98
        $region90: #{tpu_custom_call.1} parent=83 // pred_check_branch
          %683 = sbr.rel (%p681) target = $region92
        $region91: #{tpu_custom_call.1} parent=83 // pred_region
          %684 = dma.done %s677, 64
        $region92: #{tpu_custom_call.1} parent=83 // pred_fallthru
          _
        %s685 = sand.u32 %s39, 1
        %s686 = scalar_lea.sflag [#allocation9], %s685
        %s687 = sand.u32 %s137, 1
        %s688 = smul.addr %s687, 3
        %s689 = scalar_lea.vmem [#allocation10], %s688
        // Predicated region
        $region93: #{tpu_custom_call.1} parent=83 // pred_check
          %p690 = pneg %p150
        $region94: #{tpu_custom_call.1} parent=83 // pred_check_branch
          %692 = sbr.rel (%p690) target = $region96
        $region95: #{tpu_custom_call.1} parent=83 // pred_region
          %693 = dma.done %s686, 48
        $region96: #{tpu_custom_call.1} parent=83 // pred_fallthru
          _
        %s694 = sand.u32 %s39, 1
        %s695 = scalar_lea.sflag [#allocation12], %s694
        %s696 = sand.u32 %s163, 1
        %s697 = smul.addr %s696, 16
        %s698 = scalar_lea.vmem [#allocation11], %s697
        // Predicated region
        $region97: #{tpu_custom_call.1} parent=83 // pred_check
          %p699 = pneg %p176
        $region98: #{tpu_custom_call.1} parent=83 // pred_check_branch
          %701 = sbr.rel (%p699) target = $region100
        $region99: #{tpu_custom_call.1} parent=83 // pred_region
          %702 = dma.done %s695, 256
        $region100: #{tpu_custom_call.1} parent=83 // pred_fallthru
          _
        %s703 = sand.u32 %s39, 1
        %s704 = scalar_lea.sflag [#allocation12], %s703
        %s705 = sand.u32 %s267, 1
        %s706 = smul.addr %s705, 16
        %s707 = scalar_lea.vmem [#allocation13], %s706
        // Predicated region
        $region101: #{tpu_custom_call.1} parent=83 // pred_check
          %p708 = pneg %p280
        $region102: #{tpu_custom_call.1} parent=83 // pred_check_branch
          %710 = sbr.rel (%p708) target = $region104
        $region103: #{tpu_custom_call.1} parent=83 // pred_region
          %711 = dma.done %s704, 256
        $region104: #{tpu_custom_call.1} parent=83 // pred_fallthru
          _
        %s712 = sand.u32 %s59, 1
        %s713 = scalar_lea.sflag [#allocation6], %s712
        %s714 = sand.u32 %s59, 1
        %s715 = smul.addr %s714, 8
        %s716 = scalar_lea.vmem [#allocation5], %s715
        %p717 = pneg %p72
        %p718 = pneg %p69
        %s719 = sand.u32 %s39, 1
        %s720 = scalar_lea.sflag [#allocation9], %s719
        %s721 = sand.u32 %s85, 1
        %s722 = smul.addr %s721, 4
        %s723 = scalar_lea.vmem [#allocation8], %s722
        %p724 = pneg %p98
        %p725 = pneg %p95
        %p726 = scmp.lt.s32.totalorder %s44, 1
        %s727 = scalar_select %p726, %s44, 1
        %s728 = smul.addr %s727, 12
        %s729 = smul.addr %s728, 4
        %s730 = scalar_lea.vmem %s2, %s729
        %p731 = pneg %p124
        %p732 = pneg %p121
        %s733 = sand.u32 %s39, 1
        %s734 = scalar_lea.sflag [#allocation9], %s733
        %s735 = sand.u32 %s137, 1
        %s736 = smul.addr %s735, 3
        %s737 = scalar_lea.vmem [#allocation10], %s736
        %p738 = pneg %p150
        %p739 = pneg %p147
        %s740 = sand.u32 %s39, 1
        %s741 = scalar_lea.sflag [#allocation12], %s740
        %s742 = sand.u32 %s163, 1
        %s743 = smul.addr %s742, 16
        %s744 = scalar_lea.vmem [#allocation11], %s743
        %p745 = pneg %p176
        %p746 = pneg %p173
        %p747 = scmp.lt.s32.totalorder %s44, 1
        %s748 = scalar_select %p747, %s44, 1
        %s749 = scalar_lea.vmem %s5, %s748
        %p750 = pneg %p202
        %p751 = pneg %p199
        %p752 = scmp.lt.s32.totalorder %s44, 1
        %s753 = scalar_select %p752, %s44, 1
        %s754 = scalar_lea.vmem %s6, %s753
        %p755 = pneg %p228
        %p756 = pneg %p225
        %p757 = scmp.lt.s32.totalorder %s44, 1
        %s758 = scalar_select %p757, %s44, 1
        %s759 = scalar_lea.vmem %s7, %s758
        %p760 = pneg %p254
        %p761 = pneg %p251
        %s762 = sand.u32 %s39, 1
        %s763 = scalar_lea.sflag [#allocation12], %s762
        %s764 = sand.u32 %s267, 1
        %s765 = smul.addr %s764, 16
        %s766 = scalar_lea.vmem [#allocation13], %s765
        %p767 = pneg %p280
        %p768 = pneg %p277
        %p769 = scmp.lt.s32.totalorder %s44, 1
        %s770 = scalar_select %p769, %s44, 1
        %s771 = scalar_lea.vmem %s9, %s770
        %p772 = pneg %p306
        %p773 = pneg %p303
        %p774 = scmp.lt.s32.totalorder %s44, 1
        %s775 = scalar_select %p774, %s44, 1
        %s776 = smul.addr %s775, 8
        %s777 = smul.addr %s776, 4
        %s778 = scalar_lea.vmem %s10, %s777
        %p779 = pneg %p332
        %p780 = pneg %p329
        %p781 = scmp.lt.s32.totalorder %s44, 1
        %s782 = scalar_select %p781, %s44, 1
        %s783 = scalar_lea.vmem %s11, %s782
        %p784 = pneg %p358
        %p785 = pneg %p355
        %p786 = scmp.lt.s32.totalorder %s44, 1
        %s787 = scalar_select %p786, %s44, 1
        %s788 = scalar_lea.vmem %s12, %s787
        %p789 = pneg %p384
        %p790 = pneg %p381
        %p791 = scmp.lt.s32.totalorder %s44, 1
        %s792 = scalar_select %p791, %s44, 1
        %s793 = scalar_lea.vmem %s13, %s792
        %p794 = pneg %p410
        %p795 = pneg %p407
        %p796 = pneg %p431
        %p797 = pneg %p428
        %p798 = pneg %p452
        %p799 = pneg %p449
        %p800 = pneg %p478
        %p801 = pneg %p475
        %s802 = sand.u32 %s465, 1
        %s803 = scalar_lea.sflag [#allocation7], %s802
        %s804 = sand.u32 %s465, 1
        %s805 = smul.addr %s804, 8
        %s806 = scalar_lea.vmem [#allocation14], %s805
        %p807 = scmp.lt.s32.totalorder %s44, 1
        %s808 = scalar_select %p807, %s44, 1
        %s809 = smul.addr %s808, 12
        %s810 = smul.addr %s809, 4
        %s811 = scalar_lea.vmem %s2, %s810
        %p812 = scmp.lt.s32.totalorder %s44, 1
        %s813 = scalar_select %p812, %s44, 1
        %s814 = scalar_lea.vmem %s5, %s813
        %p815 = scmp.lt.s32.totalorder %s44, 1
        %s816 = scalar_select %p815, %s44, 1
        %s817 = scalar_lea.vmem %s6, %s816
        %p818 = scmp.lt.s32.totalorder %s44, 1
        %s819 = scalar_select %p818, %s44, 1
        %s820 = scalar_lea.vmem %s7, %s819
        %p821 = scmp.lt.s32.totalorder %s44, 1
        %s822 = scalar_select %p821, %s44, 1
        %s823 = scalar_lea.vmem %s9, %s822
        %p824 = scmp.lt.s32.totalorder %s44, 1
        %s825 = scalar_select %p824, %s44, 1
        %s826 = smul.addr %s825, 8
        %s827 = smul.addr %s826, 4
        %s828 = scalar_lea.vmem %s10, %s827
        %p829 = scmp.lt.s32.totalorder %s44, 1
        %s830 = scalar_select %p829, %s44, 1
        %s831 = scalar_lea.vmem %s11, %s830
        %p832 = scmp.lt.s32.totalorder %s44, 1
        %s833 = scalar_select %p832, %s44, 1
        %s834 = scalar_lea.vmem %s12, %s833
        %p835 = scmp.lt.s32.totalorder %s44, 1
        %s836 = scalar_select %p835, %s44, 1
        %s837 = scalar_lea.vmem %s13, %s836
        %p839 = scmp.eq.s32.totalorder %s44, 0
        // Predicated region
        $region105: #{tpu_custom_call.1} parent=83 // pred_check
          %p840 = pneg %p839
        $region106: #{tpu_custom_call.1} parent=83 // pred_check_branch
          %842 = sbr.rel (%p840) target = $region108
        $region107: #{tpu_custom_call.1} parent=83 // pred_region
          %v843 = vld [vmem:[%s671] sm:$0xff]
          %vm844 = vcmask 261120
          %845 = vst.msk [vmem:[#allocation2] sm:$0xff] %vm844, %v843
        $region108: #{tpu_custom_call.1} parent=83 // pred_fallthru
          _
        %v846 = vld [vmem:[#allocation2] sm:$0xff]
        %v847 = vld [vmem:[%s680] sm:$0xf]
        %v848 = vunpack.c.l.bf16 %v847
        %v849 = vadd.f32 %v846, %v848
        %v850 = vpack.c.bf16 %v849, %v849
        %v851 = vpack.c.bf16 %v846, %v846
        %v852 = vld [vmem:[%s811] sm:$0xf]
        %v853 = vld [vmem:[%s811 + $0x4] sm:$0xf]
        %v854 = vld [vmem:[%s811 + $0x8] sm:$0xf]
        %v855 = vld [vmem:[%s811 + $0xc] sm:$0xf]
        %s856 = scalar_lea.vmem %s811, 16
        %v857 = vld [vmem:[%s856] sm:$0xf]
        %v858 = vld [vmem:[%s856 + $0x4] sm:$0xf]
        %v859 = vld [vmem:[%s856 + $0x8] sm:$0xf]
        %v860 = vld [vmem:[%s856 + $0xc] sm:$0xf]
        %s861 = scalar_lea.vmem %s811, 32
        %v862 = vld [vmem:[%s861] sm:$0xf]
        %v863 = vld [vmem:[%s861 + $0x4] sm:$0xf]
        %v864 = vld [vmem:[%s861 + $0x8] sm:$0xf]
        %v865 = vld [vmem:[%s861 + $0xc] sm:$0xf]
        %v866 = vld [vmem:[%s689] sm:$0x1]
        %s867 = scalar_lea.vmem %s689, 1 [#allocation10]
        %v868 = vld [vmem:[%s867] sm:$0x1]
        %s869 = scalar_lea.vmem %s689, 2 [#allocation10]
        %v870 = vld [vmem:[%s869] sm:$0x1]
        %v872 = vlaneseq
        %v873 = vshrl.u32 %v872, 7
        %v874 = vsub.s32 0, %v873
        %v875 = vrot.slane %v868, %v874
        %v881 = vunpack.c.l.b16 %v857
        %v882 = vunpack.c.l.b16 %v858
        %v883 = vunpack.c.l.b16 %v859
        %v884 = vunpack.c.l.b16 %v860
        %v885 = vpack.c.b16 %v882, %v881
        %v886 = vpack.c.b16 %v884, %v883
        %vm889 = vcmask 261120
        %v891 = vsel %vm889, %v850, 0
        %893 = vmatprep.subr.bf16.mxu0 0
        %894 = vmatpush1.bf16.msra.mxu0 0
        %895 = vmatprep.subr.bf16.mxu0 0
        %896 = vmatpush1.bf16.msra.mxu0 0
        %897 = vmatprep.subr.bf16.mxu0 0
        %898 = vmatpush1.bf16.msra.mxu0 0
        %899 = vmatprep.subr.bf16.mxu0 0
        %900 = vmatpush1.bf16.msra.mxu0 0
        %901 = vmatprep.subr.bf16.mxu0 0
        %902 = vmatpush1.bf16.msra.mxu0 0
        %903 = vmatprep.subr.bf16.mxu0 0
        %904 = vmatpush1.bf16.msra.mxu0 0
        %905 = vmatprep.subr.bf16.mxu0 0
        %906 = vmatpush1.bf16.msra.mxu0 %v886
        %907 = vmatprep.subr.bf16.mxu0 0
        %908 = vmatpush1.bf16.msra.mxu0 %v885
        %909 = vmatprep.subr.bf16.mxu0 0
        %910 = vmatpush2.bf16.msra.mxu0 0
        %911 = vmatprep.subr.bf16.mxu0 0
        %912 = vmatpush2.bf16.msra.mxu0 0
        %913 = vmatprep.subr.bf16.mxu0 0
        %914 = vmatpush2.bf16.msra.mxu0 0
        %915 = vmatprep.subr.bf16.mxu0 0
        %916 = vmatpush2.bf16.msra.mxu0 0
        %917 = vmatprep.subr.bf16.mxu0 0
        %918 = vmatpush2.bf16.msra.mxu0 0
        %919 = vmatprep.subr.bf16.mxu0 0
        %920 = vmatpush2.bf16.msra.mxu0 0
        %921 = vmatprep.subr.bf16.mxu0 0
        %922 = vmatpush2.bf16.msra.mxu0 0
        %923 = vmatprep.subr.bf16.mxu0 0
        %924 = vmatpush2.bf16.msra.mxu0 0
        %925 = vmatprep.mubr.bf16.mxu0 0
        %926 = vmatmul.mubr.bf16.gmra.mxu0 %v891
        %v927 = vpop.f32.mrf.mxu0
        %v928 = vadd.f32 %v875, %v927
        %v929 = vpop.f32.mrf.mxu0
        %v930 = vpop.f32.mrf.mxu0
        %v931 = vpop.f32.mrf.mxu0
        %932 = vdwg.mxu0
        %v934 = vlaneseq
        %v935 = vshrl.u32 %v934, 7
        %v936 = vsub.s32 0, %v935
        %v937 = vrot.slane %v870, %v936
        %v943 = vunpack.c.l.b16 %v862
        %v944 = vunpack.c.l.b16 %v863
        %v945 = vunpack.c.l.b16 %v864
        %v946 = vunpack.c.l.b16 %v865
        %v947 = vpack.c.b16 %v944, %v943
        %v948 = vpack.c.b16 %v946, %v945
        %v952 = vsel %vm889, %v851, 0
        %954 = vmatprep.subr.bf16.mxu0 0
        %955 = vmatpush1.bf16.msra.mxu0 0
        %956 = vmatprep.subr.bf16.mxu0 0
        %957 = vmatpush1.bf16.msra.mxu0 0
        %958 = vmatprep.subr.bf16.mxu0 0
        %959 = vmatpush1.bf16.msra.mxu0 0
        %960 = vmatprep.subr.bf16.mxu0 0
        %961 = vmatpush1.bf16.msra.mxu0 0
        %962 = vmatprep.subr.bf16.mxu0 0
        %963 = vmatpush1.bf16.msra.mxu0 0
        %964 = vmatprep.subr.bf16.mxu0 0
        %965 = vmatpush1.bf16.msra.mxu0 0
        %966 = vmatprep.subr.bf16.mxu0 0
        %967 = vmatpush1.bf16.msra.mxu0 %v948
        %968 = vmatprep.subr.bf16.mxu0 0
        %969 = vmatpush1.bf16.msra.mxu0 %v947
        %970 = vmatprep.subr.bf16.mxu0 0
        %971 = vmatpush2.bf16.msra.mxu0 0
        %972 = vmatprep.subr.bf16.mxu0 0
        %973 = vmatpush2.bf16.msra.mxu0 0
        %974 = vmatprep.subr.bf16.mxu0 0
        %975 = vmatpush2.bf16.msra.mxu0 0
        %976 = vmatprep.subr.bf16.mxu0 0
        %977 = vmatpush2.bf16.msra.mxu0 0
        %978 = vmatprep.subr.bf16.mxu0 0
        %979 = vmatpush2.bf16.msra.mxu0 0
        %980 = vmatprep.subr.bf16.mxu0 0
        %981 = vmatpush2.bf16.msra.mxu0 0
        %982 = vmatprep.subr.bf16.mxu0 0
        %983 = vmatpush2.bf16.msra.mxu0 0
        %984 = vmatprep.subr.bf16.mxu0 0
        %985 = vmatpush2.bf16.msra.mxu0 0
        %986 = vmatprep.mubr.bf16.mxu0 0
        %987 = vmatmul.mubr.bf16.gmra.mxu0 %v952
        %v988 = vpop.f32.mrf.mxu0
        %v989 = vadd.f32 %v937, %v988
        %v990 = vpop.f32.mrf.mxu0
        %v991 = vpop.f32.mrf.mxu0
        %v992 = vpop.f32.mrf.mxu0
        %993 = vdwg.mxu0
        %v994 = vpack.c.bf16 %v928, %v928
        %996 = vrot.lane.b32.xlu0 %v994, 120
        %v997 = vpop.permute.xlu0 %996
        %998 = vrot.lane.b32.xlu0 %v994, 112
        %v999 = vpop.permute.xlu0 %998
        %1000 = vrot.lane.b32.xlu0 %v994, 104
        %v1001 = vpop.permute.xlu0 %1000
        %v1003 = vunpack.c.l.s4 1983009808
        %v1004 = vunpack.c.0.s8 %v1003
        %v1005 = vlaneseq
        %v1006 = vshrl.u32 %v1005, 7
        %v1007 = vsub.s32 %v1004, %v1006
        %v1008 = vrot.slane %v994, %v1007
        %v1011 = vunpack.c.l.s4 1983009808
        %v1012 = vunpack.c.0.s8 %v1011
        %v1013 = vlaneseq
        %v1014 = vshrl.u32 %v1013, 7
        %v1015 = vsub.s32 %v1012, %v1014
        %v1016 = vrot.slane %v999, %v1015
        %v1017 = vcombine.low %v1008, %v1016
        %v1018 = vcombine.high %v1008, %v1016
        %v1020 = vunpack.c.l.s4 1934713408
        %v1021 = vunpack.c.0.s8 %v1020
        %v1022 = vlaneseq
        %v1023 = vshrl.u32 %v1022, 7
        %v1024 = vsub.s32 %v1021, %v1023
        %v1025 = vrot.slane %v1017, %v1024
        %v1027 = vunpack.c.l.s4 1934713408
        %v1028 = vunpack.c.0.s8 %v1027
        %v1029 = vlaneseq
        %v1030 = vshrl.u32 %v1029, 7
        %v1031 = vsub.s32 %v1028, %v1030
        %v1032 = vrot.slane %v1018, %v1031
        %v1033 = vcombine.high %v1025, 0
        %v1034 = vcombine.high %v1032, 0
        %v1037 = vunpack.c.l.s4 1983009808
        %v1038 = vunpack.c.0.s8 %v1037
        %v1039 = vlaneseq
        %v1040 = vshrl.u32 %v1039, 7
        %v1041 = vsub.s32 %v1038, %v1040
        %v1042 = vrot.slane %v997, %v1041
        %v1045 = vunpack.c.l.s4 1983009808
        %v1046 = vunpack.c.0.s8 %v1045
        %v1047 = vlaneseq
        %v1048 = vshrl.u32 %v1047, 7
        %v1049 = vsub.s32 %v1046, %v1048
        %v1050 = vrot.slane %v1001, %v1049
        %v1051 = vcombine.low %v1042, %v1050
        %v1052 = vcombine.high %v1042, %v1050
        %v1054 = vunpack.c.l.s4 1934713408
        %v1055 = vunpack.c.0.s8 %v1054
        %v1056 = vlaneseq
        %v1057 = vshrl.u32 %v1056, 7
        %v1058 = vsub.s32 %v1055, %v1057
        %v1059 = vrot.slane %v1051, %v1058
        %v1061 = vunpack.c.l.s4 1934713408
        %v1062 = vunpack.c.0.s8 %v1061
        %v1063 = vlaneseq
        %v1064 = vshrl.u32 %v1063, 7
        %v1065 = vsub.s32 %v1062, %v1064
        %v1066 = vrot.slane %v1052, %v1065
        %v1067 = vcombine.high %v1059, 0
        %v1068 = vcombine.high %v1066, 0
        %v1071 = vpack.i.b16 %v1059, %v1025
        %v1073 = vshrl.u32 %v1025, 16
        %v1074 = vshrl.u32 %v1059, 16
        %v1075 = vpack.i.b16 %v1074, %v1073
        %v1079 = vpack.i.b16 %v1067, %v1033
        %v1081 = vshrl.u32 %v1033, 16
        %v1082 = vshrl.u32 %v1067, 16
        %v1083 = vpack.i.b16 %v1082, %v1081
        %v1087 = vpack.i.b16 %v1066, %v1032
        %v1089 = vshrl.u32 %v1032, 16
        %v1090 = vshrl.u32 %v1066, 16
        %v1091 = vpack.i.b16 %v1090, %v1089
        %v1095 = vpack.i.b16 %v1068, %v1034
        %v1097 = vshrl.u32 %v1034, 16
        %v1098 = vshrl.u32 %v1068, 16
        %v1099 = vpack.i.b16 %v1098, %v1097
        %v1101 = vcombine.low %v1071, %v1087
        %v1103 = vunpack.c.l.s4 1983009808
        %v1104 = vunpack.c.0.s8 %v1103
        %v1105 = vlaneseq
        %v1106 = vshrl.u32 %v1105, 7
        %v1107 = vsub.s32 %v1104, %v1106
        %v1108 = vrot.slane %v1101, %v1107
        %v1109 = vcombine.low %v1079, %v1095
        %v1111 = vunpack.c.l.s4 1983009808
        %v1112 = vunpack.c.0.s8 %v1111
        %v1113 = vlaneseq
        %v1114 = vshrl.u32 %v1113, 7
        %v1115 = vsub.s32 %v1112, %v1114
        %v1116 = vrot.slane %v1109, %v1115
        %v1117 = vcombine.low %v1108, %v1116
        %v1119 = vunpack.c.l.s4 1934713408
        %v1120 = vunpack.c.0.s8 %v1119
        %v1121 = vlaneseq
        %v1122 = vshrl.u32 %v1121, 7
        %v1123 = vsub.s32 %v1120, %v1122
        %v1124 = vrot.slane %v1117, %v1123
        %v1125 = vcombine.high %v1124, 0
        %v1126 = vcombine.low %v1075, %v1091
        %v1128 = vunpack.c.l.s4 1983009808
        %v1129 = vunpack.c.0.s8 %v1128
        %v1130 = vlaneseq
        %v1131 = vshrl.u32 %v1130, 7
        %v1132 = vsub.s32 %v1129, %v1131
        %v1133 = vrot.slane %v1126, %v1132
        %v1134 = vcombine.low %v1083, %v1099
        %v1136 = vunpack.c.l.s4 1983009808
        %v1137 = vunpack.c.0.s8 %v1136
        %v1138 = vlaneseq
        %v1139 = vshrl.u32 %v1138, 7
        %v1140 = vsub.s32 %v1137, %v1139
        %v1141 = vrot.slane %v1134, %v1140
        %v1142 = vcombine.low %v1133, %v1141
        %v1144 = vunpack.c.l.s4 1934713408
        %v1145 = vunpack.c.0.s8 %v1144
        %v1146 = vlaneseq
        %v1147 = vshrl.u32 %v1146, 7
        %v1148 = vsub.s32 %v1145, %v1147
        %v1149 = vrot.slane %v1142, %v1148
        %v1150 = vcombine.high %v1149, 0
        %v1153 = vpack.i.b16 %v1149, %v1124
        %v1155 = vshrl.u32 %v1124, 16
        %v1156 = vshrl.u32 %v1149, 16
        %v1157 = vpack.i.b16 %v1156, %v1155
        %v1161 = vpack.i.b16 %v1150, %v1125
        %v1163 = vshrl.u32 %v1125, 16
        %v1164 = vshrl.u32 %v1150, 16
        %v1165 = vpack.i.b16 %v1164, %v1163
        %vm1167 = vcmask 60416
        %1168 = vst.msk [vmem:[#allocation3] sm:$0xf] %vm1167, %v1153
        %1169 = vst.msk [vmem:[#allocation3 + $0x4] sm:$0xf] %vm1167, %v1157
        %1170 = vst.msk [vmem:[#allocation3 + $0x8] sm:$0xf] %vm1167, %v1161
        %1171 = vst.msk [vmem:[#allocation3 + $0xc] sm:$0xf] %vm1167, %v1165
        %v1172 = vpack.c.bf16 %v989, %v989
        %1174 = vrot.lane.b32.xlu0 %v1172, 120
        %v1175 = vpop.permute.xlu0 %1174
        %1176 = vrot.lane.b32.xlu0 %v1172, 112
        %v1177 = vpop.permute.xlu0 %1176
        %1178 = vrot.lane.b32.xlu0 %v1172, 104
        %v1179 = vpop.permute.xlu0 %1178
        %v1181 = vunpack.c.l.s4 1983009808
        %v1182 = vunpack.c.0.s8 %v1181
        %v1183 = vlaneseq
        %v1184 = vshrl.u32 %v1183, 7
        %v1185 = vsub.s32 %v1182, %v1184
        %v1186 = vrot.slane %v1172, %v1185
        %v1189 = vunpack.c.l.s4 1983009808
        %v1190 = vunpack.c.0.s8 %v1189
        %v1191 = vlaneseq
        %v1192 = vshrl.u32 %v1191, 7
        %v1193 = vsub.s32 %v1190, %v1192
        %v1194 = vrot.slane %v1177, %v1193
        %v1195 = vcombine.low %v1186, %v1194
        %v1196 = vcombine.high %v1186, %v1194
        %v1198 = vunpack.c.l.s4 1934713408
        %v1199 = vunpack.c.0.s8 %v1198
        %v1200 = vlaneseq
        %v1201 = vshrl.u32 %v1200, 7
        %v1202 = vsub.s32 %v1199, %v1201
        %v1203 = vrot.slane %v1195, %v1202
        %v1205 = vunpack.c.l.s4 1934713408
        %v1206 = vunpack.c.0.s8 %v1205
        %v1207 = vlaneseq
        %v1208 = vshrl.u32 %v1207, 7
        %v1209 = vsub.s32 %v1206, %v1208
        %v1210 = vrot.slane %v1196, %v1209
        %v1211 = vcombine.high %v1203, 0
        %v1212 = vcombine.high %v1210, 0
        %v1215 = vunpack.c.l.s4 1983009808
        %v1216 = vunpack.c.0.s8 %v1215
        %v1217 = vlaneseq
        %v1218 = vshrl.u32 %v1217, 7
        %v1219 = vsub.s32 %v1216, %v1218
        %v1220 = vrot.slane %v1175, %v1219
        %v1223 = vunpack.c.l.s4 1983009808
        %v1224 = vunpack.c.0.s8 %v1223
        %v1225 = vlaneseq
        %v1226 = vshrl.u32 %v1225, 7
        %v1227 = vsub.s32 %v1224, %v1226
        %v1228 = vrot.slane %v1179, %v1227
        %v1229 = vcombine.low %v1220, %v1228
        %v1230 = vcombine.high %v1220, %v1228
        %v1232 = vunpack.c.l.s4 1934713408
        %v1233 = vunpack.c.0.s8 %v1232
        %v1234 = vlaneseq
        %v1235 = vshrl.u32 %v1234, 7
        %v1236 = vsub.s32 %v1233, %v1235
        %v1237 = vrot.slane %v1229, %v1236
        %v1239 = vunpack.c.l.s4 1934713408
        %v1240 = vunpack.c.0.s8 %v1239
        %v1241 = vlaneseq
        %v1242 = vshrl.u32 %v1241, 7
        %v1243 = vsub.s32 %v1240, %v1242
        %v1244 = vrot.slane %v1230, %v1243
        %v1245 = vcombine.high %v1237, 0
        %v1246 = vcombine.high %v1244, 0
        %v1249 = vpack.i.b16 %v1237, %v1203
        %v1251 = vshrl.u32 %v1203, 16
        %v1252 = vshrl.u32 %v1237, 16
        %v1253 = vpack.i.b16 %v1252, %v1251
        %v1257 = vpack.i.b16 %v1245, %v1211
        %v1259 = vshrl.u32 %v1211, 16
        %v1260 = vshrl.u32 %v1245, 16
        %v1261 = vpack.i.b16 %v1260, %v1259
        %v1265 = vpack.i.b16 %v1244, %v1210
        %v1267 = vshrl.u32 %v1210, 16
        %v1268 = vshrl.u32 %v1244, 16
        %v1269 = vpack.i.b16 %v1268, %v1267
        %v1273 = vpack.i.b16 %v1246, %v1212
        %v1275 = vshrl.u32 %v1212, 16
        %v1276 = vshrl.u32 %v1246, 16
        %v1277 = vpack.i.b16 %v1276, %v1275
        %v1279 = vcombine.low %v1249, %v1265
        %v1281 = vunpack.c.l.s4 1983009808
        %v1282 = vunpack.c.0.s8 %v1281
        %v1283 = vlaneseq
        %v1284 = vshrl.u32 %v1283, 7
        %v1285 = vsub.s32 %v1282, %v1284
        %v1286 = vrot.slane %v1279, %v1285
        %v1287 = vcombine.low %v1257, %v1273
        %v1289 = vunpack.c.l.s4 1983009808
        %v1290 = vunpack.c.0.s8 %v1289
        %v1291 = vlaneseq
        %v1292 = vshrl.u32 %v1291, 7
        %v1293 = vsub.s32 %v1290, %v1292
        %v1294 = vrot.slane %v1287, %v1293
        %v1295 = vcombine.low %v1286, %v1294
        %v1297 = vunpack.c.l.s4 1934713408
        %v1298 = vunpack.c.0.s8 %v1297
        %v1299 = vlaneseq
        %v1300 = vshrl.u32 %v1299, 7
        %v1301 = vsub.s32 %v1298, %v1300
        %v1302 = vrot.slane %v1295, %v1301
        %v1303 = vcombine.high %v1302, 0
        %v1304 = vcombine.low %v1253, %v1269
        %v1306 = vunpack.c.l.s4 1983009808
        %v1307 = vunpack.c.0.s8 %v1306
        %v1308 = vlaneseq
        %v1309 = vshrl.u32 %v1308, 7
        %v1310 = vsub.s32 %v1307, %v1309
        %v1311 = vrot.slane %v1304, %v1310
        %v1312 = vcombine.low %v1261, %v1277
        %v1314 = vunpack.c.l.s4 1983009808
        %v1315 = vunpack.c.0.s8 %v1314
        %v1316 = vlaneseq
        %v1317 = vshrl.u32 %v1316, 7
        %v1318 = vsub.s32 %v1315, %v1317
        %v1319 = vrot.slane %v1312, %v1318
        %v1320 = vcombine.low %v1311, %v1319
        %v1322 = vunpack.c.l.s4 1934713408
        %v1323 = vunpack.c.0.s8 %v1322
        %v1324 = vlaneseq
        %v1325 = vshrl.u32 %v1324, 7
        %v1326 = vsub.s32 %v1323, %v1325
        %v1327 = vrot.slane %v1320, %v1326
        %v1328 = vcombine.high %v1327, 0
        %v1331 = vpack.i.b16 %v1327, %v1302
        %v1333 = vshrl.u32 %v1302, 16
        %v1334 = vshrl.u32 %v1327, 16
        %v1335 = vpack.i.b16 %v1334, %v1333
        %v1339 = vpack.i.b16 %v1328, %v1303
        %v1341 = vshrl.u32 %v1303, 16
        %v1342 = vshrl.u32 %v1328, 16
        %v1343 = vpack.i.b16 %v1342, %v1341
        %1345 = vst.msk [vmem:[#allocation4] sm:$0xf] %vm1167, %v1331
        %1346 = vst.msk [vmem:[#allocation4 + $0x4] sm:$0xf] %vm1167, %v1335
        %1347 = vst.msk [vmem:[#allocation4 + $0x8] sm:$0xf] %vm1167, %v1339
        %1348 = vst.msk [vmem:[#allocation4 + $0xc] sm:$0xf] %vm1167, %v1343
        %v1349 = vld [vmem:[#allocation3] sm:$0xf]
        %v1350 = vld [vmem:[#allocation3 + $0x4] sm:$0xf]
        %v1351 = vld [vmem:[#allocation3 + $0x8] sm:$0xf]
        %v1352 = vld [vmem:[#allocation3 + $0xc] sm:$0xf]
        %v1353 = vld [vmem:[#allocation4] sm:$0xf]
        %v1354 = vld [vmem:[#allocation4 + $0x4] sm:$0xf]
        %v1355 = vld [vmem:[#allocation4 + $0x8] sm:$0xf]
        %v1356 = vld [vmem:[#allocation4 + $0xc] sm:$0xf]
        %v1357 = vld [vmem:[%s698] sm:$0xf]
        %v1358 = vld [vmem:[%s698 + $0x4] sm:$0xf]
        %v1359 = vld [vmem:[%s698 + $0x8] sm:$0xf]
        %v1360 = vld [vmem:[%s698 + $0xc] sm:$0xf]
        %v1361 = vld [vmem:[%s814] sm:$0x1]
        %v1362 = vld [vmem:[%s817] sm:$0x1]
        %v1363 = vld [vmem:[%s820] sm:$0x1]
        %v1364 = vld [vmem:[%s707] sm:$0xf]
        %v1365 = vld [vmem:[%s707 + $0x4] sm:$0xf]
        %v1366 = vld [vmem:[%s707 + $0x8] sm:$0xf]
        %v1367 = vld [vmem:[%s707 + $0xc] sm:$0xf]
        %v1368 = vld [vmem:[%s823] sm:$0x1]
        %v1369 = vld [vmem:[%s828] sm:$0xf]
        %v1370 = vld [vmem:[%s828 + $0x4] sm:$0xf]
        %v1371 = vld [vmem:[%s828 + $0x8] sm:$0xf]
        %v1372 = vld [vmem:[%s828 + $0xc] sm:$0xf]
        %v1373 = vld [vmem:[%s828 + $0x10] sm:$0xf]
        %v1374 = vld [vmem:[%s828 + $0x14] sm:$0xf]
        %v1375 = vld [vmem:[%s828 + $0x18] sm:$0xf]
        %v1376 = vld [vmem:[%s828 + $0x1c] sm:$0xf]
        %v1377 = vld [vmem:[%s831] sm:$0x1]
        %v1378 = vld [vmem:[%s834] sm:$0x1]
        %v1379 = vld [vmem:[%s837] sm:$0x1]
        %v1381 = vlaneseq
        %v1382 = vshrl.u32 %v1381, 7
        %v1383 = vsub.s32 0, %v1382
        %v1384 = vrot.slane %v866, %v1383
        %v1390 = vunpack.c.l.b16 %v852
        %v1391 = vunpack.c.l.b16 %v853
        %v1392 = vunpack.c.l.b16 %v854
        %v1393 = vunpack.c.l.b16 %v855
        %v1394 = vpack.c.b16 %v1391, %v1390
        %v1395 = vpack.c.b16 %v1393, %v1392
        %1398 = vmatprep.subr.bf16.mxu0 0
        %1399 = vmatpush1.bf16.msra.mxu0 0
        %1400 = vmatprep.subr.bf16.mxu0 0
        %1401 = vmatpush1.bf16.msra.mxu0 0
        %1402 = vmatprep.subr.bf16.mxu0 0
        %1403 = vmatpush1.bf16.msra.mxu0 0
        %1404 = vmatprep.subr.bf16.mxu0 0
        %1405 = vmatpush1.bf16.msra.mxu0 0
        %1406 = vmatprep.subr.bf16.mxu0 0
        %1407 = vmatpush1.bf16.msra.mxu0 0
        %1408 = vmatprep.subr.bf16.mxu0 0
        %1409 = vmatpush1.bf16.msra.mxu0 0
        %1410 = vmatprep.subr.bf16.mxu0 0
        %1411 = vmatpush1.bf16.msra.mxu0 %v1395
        %1412 = vmatprep.subr.bf16.mxu0 0
        %1413 = vmatpush1.bf16.msra.mxu0 %v1394
        %1414 = vmatprep.subr.bf16.mxu0 0
        %1415 = vmatpush2.bf16.msra.mxu0 0
        %1416 = vmatprep.subr.bf16.mxu0 0
        %1417 = vmatpush2.bf16.msra.mxu0 0
        %1418 = vmatprep.subr.bf16.mxu0 0
        %1419 = vmatpush2.bf16.msra.mxu0 0
        %1420 = vmatprep.subr.bf16.mxu0 0
        %1421 = vmatpush2.bf16.msra.mxu0 0
        %1422 = vmatprep.subr.bf16.mxu0 0
        %1423 = vmatpush2.bf16.msra.mxu0 0
        %1424 = vmatprep.subr.bf16.mxu0 0
        %1425 = vmatpush2.bf16.msra.mxu0 0
        %1426 = vmatprep.subr.bf16.mxu0 0
        %1427 = vmatpush2.bf16.msra.mxu0 0
        %1428 = vmatprep.subr.bf16.mxu0 0
        %1429 = vmatpush2.bf16.msra.mxu0 0
        %1430 = vmatprep.mubr.bf16.mxu0 0
        %1431 = vmatmul.mubr.bf16.gmra.mxu0 %v891
        %v1432 = vpop.f32.mrf.mxu0
        %v1433 = vadd.f32 %v1384, %v1432
        %v1434 = vpop.f32.mrf.mxu0
        %v1435 = vpop.f32.mrf.mxu0
        %v1436 = vpop.f32.mrf.mxu0
        %1437 = vdwg.mxu0
        %v1438 = vmul.f32 %v1433, 0.35355338
        %v1439 = vpack.c.bf16 %v1438, %v1438
        %1441 = vrot.lane.b32.xlu0 %v1439, 120
        %v1442 = vpop.permute.xlu0 %1441
        %1443 = vrot.lane.b32.xlu0 %v1439, 112
        %v1444 = vpop.permute.xlu0 %1443
        %1445 = vrot.lane.b32.xlu0 %v1439, 104
        %v1446 = vpop.permute.xlu0 %1445
        %v1448 = vunpack.c.l.s4 1983009808
        %v1449 = vunpack.c.0.s8 %v1448
        %v1450 = vlaneseq
        %v1451 = vshrl.u32 %v1450, 7
        %v1452 = vsub.s32 %v1449, %v1451
        %v1453 = vrot.slane %v1439, %v1452
        %v1456 = vunpack.c.l.s4 1983009808
        %v1457 = vunpack.c.0.s8 %v1456
        %v1458 = vlaneseq
        %v1459 = vshrl.u32 %v1458, 7
        %v1460 = vsub.s32 %v1457, %v1459
        %v1461 = vrot.slane %v1444, %v1460
        %v1462 = vcombine.low %v1453, %v1461
        %v1463 = vcombine.high %v1453, %v1461
        %v1465 = vunpack.c.l.s4 1934713408
        %v1466 = vunpack.c.0.s8 %v1465
        %v1467 = vlaneseq
        %v1468 = vshrl.u32 %v1467, 7
        %v1469 = vsub.s32 %v1466, %v1468
        %v1470 = vrot.slane %v1462, %v1469
        %v1472 = vunpack.c.l.s4 1934713408
        %v1473 = vunpack.c.0.s8 %v1472
        %v1474 = vlaneseq
        %v1475 = vshrl.u32 %v1474, 7
        %v1476 = vsub.s32 %v1473, %v1475
        %v1477 = vrot.slane %v1463, %v1476
        %v1478 = vcombine.high %v1470, 0
        %v1479 = vcombine.high %v1477, 0
        %v1482 = vunpack.c.l.s4 1983009808
        %v1483 = vunpack.c.0.s8 %v1482
        %v1484 = vlaneseq
        %v1485 = vshrl.u32 %v1484, 7
        %v1486 = vsub.s32 %v1483, %v1485
        %v1487 = vrot.slane %v1442, %v1486
        %v1490 = vunpack.c.l.s4 1983009808
        %v1491 = vunpack.c.0.s8 %v1490
        %v1492 = vlaneseq
        %v1493 = vshrl.u32 %v1492, 7
        %v1494 = vsub.s32 %v1491, %v1493
        %v1495 = vrot.slane %v1446, %v1494
        %v1496 = vcombine.low %v1487, %v1495
        %v1497 = vcombine.high %v1487, %v1495
        %v1499 = vunpack.c.l.s4 1934713408
        %v1500 = vunpack.c.0.s8 %v1499
        %v1501 = vlaneseq
        %v1502 = vshrl.u32 %v1501, 7
        %v1503 = vsub.s32 %v1500, %v1502
        %v1504 = vrot.slane %v1496, %v1503
        %v1506 = vunpack.c.l.s4 1934713408
        %v1507 = vunpack.c.0.s8 %v1506
        %v1508 = vlaneseq
        %v1509 = vshrl.u32 %v1508, 7
        %v1510 = vsub.s32 %v1507, %v1509
        %v1511 = vrot.slane %v1497, %v1510
        %v1512 = vcombine.high %v1504, 0
        %v1513 = vcombine.high %v1511, 0
        %v1516 = vpack.i.b16 %v1504, %v1470
        %v1518 = vshrl.u32 %v1470, 16
        %v1519 = vshrl.u32 %v1504, 16
        %v1520 = vpack.i.b16 %v1519, %v1518
        %v1524 = vpack.i.b16 %v1512, %v1478
        %v1526 = vshrl.u32 %v1478, 16
        %v1527 = vshrl.u32 %v1512, 16
        %v1528 = vpack.i.b16 %v1527, %v1526
        %v1532 = vpack.i.b16 %v1511, %v1477
        %v1534 = vshrl.u32 %v1477, 16
        %v1535 = vshrl.u32 %v1511, 16
        %v1536 = vpack.i.b16 %v1535, %v1534
        %v1540 = vpack.i.b16 %v1513, %v1479
        %v1542 = vshrl.u32 %v1479, 16
        %v1543 = vshrl.u32 %v1513, 16
        %v1544 = vpack.i.b16 %v1543, %v1542
        %v1546 = vcombine.low %v1516, %v1532
        %v1548 = vunpack.c.l.s4 1983009808
        %v1549 = vunpack.c.0.s8 %v1548
        %v1550 = vlaneseq
        %v1551 = vshrl.u32 %v1550, 7
        %v1552 = vsub.s32 %v1549, %v1551
        %v1553 = vrot.slane %v1546, %v1552
        %v1554 = vcombine.low %v1524, %v1540
        %v1556 = vunpack.c.l.s4 1983009808
        %v1557 = vunpack.c.0.s8 %v1556
        %v1558 = vlaneseq
        %v1559 = vshrl.u32 %v1558, 7
        %v1560 = vsub.s32 %v1557, %v1559
        %v1561 = vrot.slane %v1554, %v1560
        %v1562 = vcombine.low %v1553, %v1561
        %v1564 = vunpack.c.l.s4 1934713408
        %v1565 = vunpack.c.0.s8 %v1564
        %v1566 = vlaneseq
        %v1567 = vshrl.u32 %v1566, 7
        %v1568 = vsub.s32 %v1565, %v1567
        %v1569 = vrot.slane %v1562, %v1568
        %v1570 = vcombine.high %v1569, 0
        %v1571 = vcombine.low %v1520, %v1536
        %v1573 = vunpack.c.l.s4 1983009808
        %v1574 = vunpack.c.0.s8 %v1573
        %v1575 = vlaneseq
        %v1576 = vshrl.u32 %v1575, 7
        %v1577 = vsub.s32 %v1574, %v1576
        %v1578 = vrot.slane %v1571, %v1577
        %v1579 = vcombine.low %v1528, %v1544
        %v1581 = vunpack.c.l.s4 1983009808
        %v1582 = vunpack.c.0.s8 %v1581
        %v1583 = vlaneseq
        %v1584 = vshrl.u32 %v1583, 7
        %v1585 = vsub.s32 %v1582, %v1584
        %v1586 = vrot.slane %v1579, %v1585
        %v1587 = vcombine.low %v1578, %v1586
        %v1589 = vunpack.c.l.s4 1934713408
        %v1590 = vunpack.c.0.s8 %v1589
        %v1591 = vlaneseq
        %v1592 = vshrl.u32 %v1591, 7
        %v1593 = vsub.s32 %v1590, %v1592
        %v1594 = vrot.slane %v1587, %v1593
        %v1595 = vcombine.high %v1594, 0
        %v1598 = vpack.i.b16 %v1594, %v1569
        %v1599 = vshrl.u32 %v1569, 16
        %v1600 = vshrl.u32 %v1594, 16
        %v1601 = vpack.i.b16 %v1600, %v1599
        %v1604 = vpack.i.b16 %v1595, %v1570
        %v1605 = vshrl.u32 %v1570, 16
        %v1606 = vshrl.u32 %v1595, 16
        %v1607 = vpack.i.b16 %v1606, %v1605
        %vm1608 = vcmask 64512
        %v1610 = vsel %vm1608, %v1598, 0
        %v1613 = vsel %vm1608, %v1349, 0
        %1615 = vmatprep.subr.bf16.mxu0 0
        %1616 = vmatpush1.bf16.xpose.msra.mxu0 0
        %1617 = vmatprep.subr.bf16.mxu0 0
        %1618 = vmatpush1.bf16.xpose.msra.mxu0 0
        %1619 = vmatprep.subr.bf16.mxu0 0
        %1620 = vmatpush1.bf16.xpose.msra.mxu0 0
        %1621 = vmatprep.subr.bf16.mxu0 0
        %1622 = vmatpush1.bf16.xpose.msra.mxu0 0
        %1623 = vmatprep.subr.bf16.mxu0 0
        %1624 = vmatpush1.bf16.xpose.msra.mxu0 0
        %1625 = vmatprep.subr.bf16.mxu0 0
        %1626 = vmatpush1.bf16.xpose.msra.mxu0 0
        %1627 = vmatprep.subr.bf16.mxu0 0
        %1628 = vmatpush1.bf16.xpose.msra.mxu0 0
        %1629 = vmatprep.subr.bf16.mxu0 0
        %1630 = vmatpush1.bf16.xpose.msra.mxu0 %v1613
        %1631 = vmatprep.subr.bf16.mxu0 0
        %1632 = vmatpush2.bf16.xpose.msra.mxu0 0
        %1633 = vmatprep.subr.bf16.mxu0 0
        %1634 = vmatpush2.bf16.xpose.msra.mxu0 0
        %1635 = vmatprep.subr.bf16.mxu0 0
        %1636 = vmatpush2.bf16.xpose.msra.mxu0 0
        %1637 = vmatprep.subr.bf16.mxu0 0
        %1638 = vmatpush2.bf16.xpose.msra.mxu0 0
        %1639 = vmatprep.subr.bf16.mxu0 0
        %1640 = vmatpush2.bf16.xpose.msra.mxu0 0
        %1641 = vmatprep.subr.bf16.mxu0 0
        %1642 = vmatpush2.bf16.xpose.msra.mxu0 0
        %1643 = vmatprep.subr.bf16.mxu0 0
        %1644 = vmatpush2.bf16.xpose.msra.mxu0 0
        %1645 = vmatprep.subr.bf16.mxu0 0
        %1646 = vmatpush2.bf16.xpose.msra.mxu0 0
        %1647 = vmatprep.mubr.bf16.mxu0 0
        %1648 = vmatmul.mubr.bf16.gmra.mxu0 %v1610
        %v1649 = vpop.f32.mrf.mxu0
        %v1650 = vadd.f32 0.0, %v1649
        %v1651 = vpop.f32.mrf.mxu0
        %v1652 = vpop.f32.mrf.mxu0
        %v1653 = vpop.f32.mrf.mxu0
        %1654 = vdwg.mxu0
        %v1656 = vsel %vm1608, %v1601, 0
        %v1659 = vsel %vm1608, %v1350, 0
        %1661 = vmatprep.subr.bf16.mxu0 0
        %1662 = vmatpush1.bf16.xpose.msra.mxu0 0
        %1663 = vmatprep.subr.bf16.mxu0 0
        %1664 = vmatpush1.bf16.xpose.msra.mxu0 0
        %1665 = vmatprep.subr.bf16.mxu0 0
        %1666 = vmatpush1.bf16.xpose.msra.mxu0 0
        %1667 = vmatprep.subr.bf16.mxu0 0
        %1668 = vmatpush1.bf16.xpose.msra.mxu0 0
        %1669 = vmatprep.subr.bf16.mxu0 0
        %1670 = vmatpush1.bf16.xpose.msra.mxu0 0
        %1671 = vmatprep.subr.bf16.mxu0 0
        %1672 = vmatpush1.bf16.xpose.msra.mxu0 0
        %1673 = vmatprep.subr.bf16.mxu0 0
        %1674 = vmatpush1.bf16.xpose.msra.mxu0 0
        %1675 = vmatprep.subr.bf16.mxu0 0
        %1676 = vmatpush1.bf16.xpose.msra.mxu0 %v1659
        %1677 = vmatprep.subr.bf16.mxu0 0
        %1678 = vmatpush2.bf16.xpose.msra.mxu0 0
        %1679 = vmatprep.subr.bf16.mxu0 0
        %1680 = vmatpush2.bf16.xpose.msra.mxu0 0
        %1681 = vmatprep.subr.bf16.mxu0 0
        %1682 = vmatpush2.bf16.xpose.msra.mxu0 0
        %1683 = vmatprep.subr.bf16.mxu0 0
        %1684 = vmatpush2.bf16.xpose.msra.mxu0 0
        %1685 = vmatprep.subr.bf16.mxu0 0
        %1686 = vmatpush2.bf16.xpose.msra.mxu0 0
        %1687 = vmatprep.subr.bf16.mxu0 0
        %1688 = vmatpush2.bf16.xpose.msra.mxu0 0
        %1689 = vmatprep.subr.bf16.mxu0 0
        %1690 = vmatpush2.bf16.xpose.msra.mxu0 0
        %1691 = vmatprep.subr.bf16.mxu0 0
        %1692 = vmatpush2.bf16.xpose.msra.mxu0 0
        %1693 = vmatprep.mubr.bf16.mxu0 0
        %1694 = vmatmul.mubr.bf16.gmra.mxu0 %v1656
        %v1695 = vpop.f32.mrf.mxu0
        %v1696 = vadd.f32 0.0, %v1695
        %v1697 = vpop.f32.mrf.mxu0
        %v1698 = vpop.f32.mrf.mxu0
        %v1699 = vpop.f32.mrf.mxu0
        %1700 = vdwg.mxu0
        %v1702 = vsel %vm1608, %v1604, 0
        %v1705 = vsel %vm1608, %v1351, 0
        %1707 = vmatprep.subr.bf16.mxu0 0
        %1708 = vmatpush1.bf16.xpose.msra.mxu0 0
        %1709 = vmatprep.subr.bf16.mxu0 0
        %1710 = vmatpush1.bf16.xpose.msra.mxu0 0
        %1711 = vmatprep.subr.bf16.mxu0 0
        %1712 = vmatpush1.bf16.xpose.msra.mxu0 0
        %1713 = vmatprep.subr.bf16.mxu0 0
        %1714 = vmatpush1.bf16.xpose.msra.mxu0 0
        %1715 = vmatprep.subr.bf16.mxu0 0
        %1716 = vmatpush1.bf16.xpose.msra.mxu0 0
        %1717 = vmatprep.subr.bf16.mxu0 0
        %1718 = vmatpush1.bf16.xpose.msra.mxu0 0
        %1719 = vmatprep.subr.bf16.mxu0 0
        %1720 = vmatpush1.bf16.xpose.msra.mxu0 0
        %1721 = vmatprep.subr.bf16.mxu0 0
        %1722 = vmatpush1.bf16.xpose.msra.mxu0 %v1705
        %1723 = vmatprep.subr.bf16.mxu0 0
        %1724 = vmatpush2.bf16.xpose.msra.mxu0 0
        %1725 = vmatprep.subr.bf16.mxu0 0
        %1726 = vmatpush2.bf16.xpose.msra.mxu0 0
        %1727 = vmatprep.subr.bf16.mxu0 0
        %1728 = vmatpush2.bf16.xpose.msra.mxu0 0
        %1729 = vmatprep.subr.bf16.mxu0 0
        %1730 = vmatpush2.bf16.xpose.msra.mxu0 0
        %1731 = vmatprep.subr.bf16.mxu0 0
        %1732 = vmatpush2.bf16.xpose.msra.mxu0 0
        %1733 = vmatprep.subr.bf16.mxu0 0
        %1734 = vmatpush2.bf16.xpose.msra.mxu0 0
        %1735 = vmatprep.subr.bf16.mxu0 0
        %1736 = vmatpush2.bf16.xpose.msra.mxu0 0
        %1737 = vmatprep.subr.bf16.mxu0 0
        %1738 = vmatpush2.bf16.xpose.msra.mxu0 0
        %1739 = vmatprep.mubr.bf16.mxu0 0
        %1740 = vmatmul.mubr.bf16.gmra.mxu0 %v1702
        %v1741 = vpop.f32.mrf.mxu0
        %v1742 = vadd.f32 0.0, %v1741
        %v1743 = vpop.f32.mrf.mxu0
        %v1744 = vpop.f32.mrf.mxu0
        %v1745 = vpop.f32.mrf.mxu0
        %1746 = vdwg.mxu0
        %v1748 = vsel %vm1608, %v1607, 0
        %v1751 = vsel %vm1608, %v1352, 0
        %1753 = vmatprep.subr.bf16.mxu0 0
        %1754 = vmatpush1.bf16.xpose.msra.mxu0 0
        %1755 = vmatprep.subr.bf16.mxu0 0
        %1756 = vmatpush1.bf16.xpose.msra.mxu0 0
        %1757 = vmatprep.subr.bf16.mxu0 0
        %1758 = vmatpush1.bf16.xpose.msra.mxu0 0
        %1759 = vmatprep.subr.bf16.mxu0 0
        %1760 = vmatpush1.bf16.xpose.msra.mxu0 0
        %1761 = vmatprep.subr.bf16.mxu0 0
        %1762 = vmatpush1.bf16.xpose.msra.mxu0 0
        %1763 = vmatprep.subr.bf16.mxu0 0
        %1764 = vmatpush1.bf16.xpose.msra.mxu0 0
        %1765 = vmatprep.subr.bf16.mxu0 0
        %1766 = vmatpush1.bf16.xpose.msra.mxu0 0
        %1767 = vmatprep.subr.bf16.mxu0 0
        %1768 = vmatpush1.bf16.xpose.msra.mxu0 %v1751
        %1769 = vmatprep.subr.bf16.mxu0 0
        %1770 = vmatpush2.bf16.xpose.msra.mxu0 0
        %1771 = vmatprep.subr.bf16.mxu0 0
        %1772 = vmatpush2.bf16.xpose.msra.mxu0 0
        %1773 = vmatprep.subr.bf16.mxu0 0
        %1774 = vmatpush2.bf16.xpose.msra.mxu0 0
        %1775 = vmatprep.subr.bf16.mxu0 0
        %1776 = vmatpush2.bf16.xpose.msra.mxu0 0
        %1777 = vmatprep.subr.bf16.mxu0 0
        %1778 = vmatpush2.bf16.xpose.msra.mxu0 0
        %1779 = vmatprep.subr.bf16.mxu0 0
        %1780 = vmatpush2.bf16.xpose.msra.mxu0 0
        %1781 = vmatprep.subr.bf16.mxu0 0
        %1782 = vmatpush2.bf16.xpose.msra.mxu0 0
        %1783 = vmatprep.subr.bf16.mxu0 0
        %1784 = vmatpush2.bf16.xpose.msra.mxu0 0
        %1785 = vmatprep.mubr.bf16.mxu0 0
        %1786 = vmatmul.mubr.bf16.gmra.mxu0 %v1748
        %v1787 = vpop.f32.mrf.mxu0
        %v1788 = vadd.f32 0.0, %v1787
        %v1789 = vpop.f32.mrf.mxu0
        %v1790 = vpop.f32.mrf.mxu0
        %v1791 = vpop.f32.mrf.mxu0
        %1792 = vdwg.mxu0
        %v1793 = vsel %vm1608, %v1650, -inf
        %1794 = vmax.xlane.f32.xlu0 %v1793
        %v1795 = vpop.xlane.xlu0 %1794
        %v1796 = vsel %vm1608, %v1696, -inf
        %1797 = vmax.xlane.f32.xlu0 %v1796
        %v1798 = vpop.xlane.xlu0 %1797
        %v1799 = vsel %vm1608, %v1742, -inf
        %1800 = vmax.xlane.f32.xlu0 %v1799
        %v1801 = vpop.xlane.xlu0 %1800
        %v1802 = vsel %vm1608, %v1788, -inf
        %1803 = vmax.xlane.f32.xlu0 %v1802
        %v1804 = vpop.xlane.xlu0 %1803
        %v1805 = vsub.f32 %v1650, %v1795
        %v1806 = vsub.f32 %v1696, %v1798
        %v1807 = vsub.f32 %v1742, %v1801
        %v1808 = vsub.f32 %v1788, %v1804
        %v1809 = vmul.f32 %v1805, 1.442695
        %v1810 = vpow.pop %v1809
        %v1811 = vmul.f32 %v1806, 1.442695
        %v1812 = vpow.pop %v1811
        %v1813 = vmul.f32 %v1807, 1.442695
        %v1814 = vpow.pop %v1813
        %v1815 = vmul.f32 %v1808, 1.442695
        %v1816 = vpow.pop %v1815
        %v1817 = vsel %vm1608, %v1810, 0.0
        %1818 = vadd.xlane.f32.xlu0 %v1817
        %v1819 = vpop.xlane.xlu0 %1818
        %v1820 = vsel %vm1608, %v1812, 0.0
        %1821 = vadd.xlane.f32.xlu0 %v1820
        %v1822 = vpop.xlane.xlu0 %1821
        %v1823 = vsel %vm1608, %v1814, 0.0
        %1824 = vadd.xlane.f32.xlu0 %v1823
        %v1825 = vpop.xlane.xlu0 %1824
        %v1826 = vsel %vm1608, %v1816, 0.0
        %1827 = vadd.xlane.f32.xlu0 %v1826
        %v1828 = vpop.xlane.xlu0 %1827
        %v1829 = vpack.c.bf16 %v1810, %v1810
        %v1830 = vpack.c.bf16 %v1812, %v1812
        %v1831 = vpack.c.bf16 %v1814, %v1814
        %v1832 = vpack.c.bf16 %v1816, %v1816
        %v1834 = vsel %vm1608, %v1829, 0
        %vm1836 = vcmask 1043456
        %v1838 = vsel %vm1836, %v1353, 0
        %1840 = vmatprep.subr.bf16.mxu0 0
        %1841 = vmatpush1.bf16.msra.mxu0 0
        %1842 = vmatprep.subr.bf16.mxu0 0
        %1843 = vmatpush1.bf16.msra.mxu0 0
        %1844 = vmatprep.subr.bf16.mxu0 0
        %1845 = vmatpush1.bf16.msra.mxu0 0
        %1846 = vmatprep.subr.bf16.mxu0 0
        %1847 = vmatpush1.bf16.msra.mxu0 0
        %1848 = vmatprep.subr.bf16.mxu0 0
        %1849 = vmatpush1.bf16.msra.mxu0 0
        %1850 = vmatprep.subr.bf16.mxu0 0
        %1851 = vmatpush1.bf16.msra.mxu0 0
        %1852 = vmatprep.subr.bf16.mxu0 0
        %1853 = vmatpush1.bf16.msra.mxu0 0
        %1854 = vmatprep.subr.bf16.mxu0 0
        %1855 = vmatpush1.bf16.msra.mxu0 %v1838
        %1856 = vmatprep.subr.bf16.mxu0 0
        %1857 = vmatpush2.bf16.msra.mxu0 0
        %1858 = vmatprep.subr.bf16.mxu0 0
        %1859 = vmatpush2.bf16.msra.mxu0 0
        %1860 = vmatprep.subr.bf16.mxu0 0
        %1861 = vmatpush2.bf16.msra.mxu0 0
        %1862 = vmatprep.subr.bf16.mxu0 0
        %1863 = vmatpush2.bf16.msra.mxu0 0
        %1864 = vmatprep.subr.bf16.mxu0 0
        %1865 = vmatpush2.bf16.msra.mxu0 0
        %1866 = vmatprep.subr.bf16.mxu0 0
        %1867 = vmatpush2.bf16.msra.mxu0 0
        %1868 = vmatprep.subr.bf16.mxu0 0
        %1869 = vmatpush2.bf16.msra.mxu0 0
        %1870 = vmatprep.subr.bf16.mxu0 0
        %1871 = vmatpush2.bf16.msra.mxu0 0
        %1872 = vmatprep.mubr.bf16.mxu0 0
        %1873 = vmatmul.mubr.bf16.gmra.mxu0 %v1834
        %v1874 = vpop.f32.mrf.mxu0
        %v1875 = vadd.f32 0.0, %v1874
        %v1876 = vpop.f32.mrf.mxu0
        %v1877 = vpop.f32.mrf.mxu0
        %v1878 = vpop.f32.mrf.mxu0
        %1879 = vdwg.mxu0
        %v1881 = vsel %vm1608, %v1830, 0
        %v1884 = vsel %vm1836, %v1354, 0
        %1886 = vmatprep.subr.bf16.mxu0 0
        %1887 = vmatpush1.bf16.msra.mxu0 0
        %1888 = vmatprep.subr.bf16.mxu0 0
        %1889 = vmatpush1.bf16.msra.mxu0 0
        %1890 = vmatprep.subr.bf16.mxu0 0
        %1891 = vmatpush1.bf16.msra.mxu0 0
        %1892 = vmatprep.subr.bf16.mxu0 0
        %1893 = vmatpush1.bf16.msra.mxu0 0
        %1894 = vmatprep.subr.bf16.mxu0 0
        %1895 = vmatpush1.bf16.msra.mxu0 0
        %1896 = vmatprep.subr.bf16.mxu0 0
        %1897 = vmatpush1.bf16.msra.mxu0 0
        %1898 = vmatprep.subr.bf16.mxu0 0
        %1899 = vmatpush1.bf16.msra.mxu0 0
        %1900 = vmatprep.subr.bf16.mxu0 0
        %1901 = vmatpush1.bf16.msra.mxu0 %v1884
        %1902 = vmatprep.subr.bf16.mxu0 0
        %1903 = vmatpush2.bf16.msra.mxu0 0
        %1904 = vmatprep.subr.bf16.mxu0 0
        %1905 = vmatpush2.bf16.msra.mxu0 0
        %1906 = vmatprep.subr.bf16.mxu0 0
        %1907 = vmatpush2.bf16.msra.mxu0 0
        %1908 = vmatprep.subr.bf16.mxu0 0
        %1909 = vmatpush2.bf16.msra.mxu0 0
        %1910 = vmatprep.subr.bf16.mxu0 0
        %1911 = vmatpush2.bf16.msra.mxu0 0
        %1912 = vmatprep.subr.bf16.mxu0 0
        %1913 = vmatpush2.bf16.msra.mxu0 0
        %1914 = vmatprep.subr.bf16.mxu0 0
        %1915 = vmatpush2.bf16.msra.mxu0 0
        %1916 = vmatprep.subr.bf16.mxu0 0
        %1917 = vmatpush2.bf16.msra.mxu0 0
        %1918 = vmatprep.mubr.bf16.mxu0 0
        %1919 = vmatmul.mubr.bf16.gmra.mxu0 %v1881
        %v1920 = vpop.f32.mrf.mxu0
        %v1921 = vadd.f32 0.0, %v1920
        %v1922 = vpop.f32.mrf.mxu0
        %v1923 = vpop.f32.mrf.mxu0
        %v1924 = vpop.f32.mrf.mxu0
        %1925 = vdwg.mxu0
        %v1927 = vsel %vm1608, %v1831, 0
        %v1930 = vsel %vm1836, %v1355, 0
        %1932 = vmatprep.subr.bf16.mxu0 0
        %1933 = vmatpush1.bf16.msra.mxu0 0
        %1934 = vmatprep.subr.bf16.mxu0 0
        %1935 = vmatpush1.bf16.msra.mxu0 0
        %1936 = vmatprep.subr.bf16.mxu0 0
        %1937 = vmatpush1.bf16.msra.mxu0 0
        %1938 = vmatprep.subr.bf16.mxu0 0
        %1939 = vmatpush1.bf16.msra.mxu0 0
        %1940 = vmatprep.subr.bf16.mxu0 0
        %1941 = vmatpush1.bf16.msra.mxu0 0
        %1942 = vmatprep.subr.bf16.mxu0 0
        %1943 = vmatpush1.bf16.msra.mxu0 0
        %1944 = vmatprep.subr.bf16.mxu0 0
        %1945 = vmatpush1.bf16.msra.mxu0 0
        %1946 = vmatprep.subr.bf16.mxu0 0
        %1947 = vmatpush1.bf16.msra.mxu0 %v1930
        %1948 = vmatprep.subr.bf16.mxu0 0
        %1949 = vmatpush2.bf16.msra.mxu0 0
        %1950 = vmatprep.subr.bf16.mxu0 0
        %1951 = vmatpush2.bf16.msra.mxu0 0
        %1952 = vmatprep.subr.bf16.mxu0 0
        %1953 = vmatpush2.bf16.msra.mxu0 0
        %1954 = vmatprep.subr.bf16.mxu0 0
        %1955 = vmatpush2.bf16.msra.mxu0 0
        %1956 = vmatprep.subr.bf16.mxu0 0
        %1957 = vmatpush2.bf16.msra.mxu0 0
        %1958 = vmatprep.subr.bf16.mxu0 0
        %1959 = vmatpush2.bf16.msra.mxu0 0
        %1960 = vmatprep.subr.bf16.mxu0 0
        %1961 = vmatpush2.bf16.msra.mxu0 0
        %1962 = vmatprep.subr.bf16.mxu0 0
        %1963 = vmatpush2.bf16.msra.mxu0 0
        %1964 = vmatprep.mubr.bf16.mxu0 0
        %1965 = vmatmul.mubr.bf16.gmra.mxu0 %v1927
        %v1966 = vpop.f32.mrf.mxu0
        %v1967 = vadd.f32 0.0, %v1966
        %v1968 = vpop.f32.mrf.mxu0
        %v1969 = vpop.f32.mrf.mxu0
        %v1970 = vpop.f32.mrf.mxu0
        %1971 = vdwg.mxu0
        %v1973 = vsel %vm1608, %v1832, 0
        %v1976 = vsel %vm1836, %v1356, 0
        %1978 = vmatprep.subr.bf16.mxu0 0
        %1979 = vmatpush1.bf16.msra.mxu0 0
        %1980 = vmatprep.subr.bf16.mxu0 0
        %1981 = vmatpush1.bf16.msra.mxu0 0
        %1982 = vmatprep.subr.bf16.mxu0 0
        %1983 = vmatpush1.bf16.msra.mxu0 0
        %1984 = vmatprep.subr.bf16.mxu0 0
        %1985 = vmatpush1.bf16.msra.mxu0 0
        %1986 = vmatprep.subr.bf16.mxu0 0
        %1987 = vmatpush1.bf16.msra.mxu0 0
        %1988 = vmatprep.subr.bf16.mxu0 0
        %1989 = vmatpush1.bf16.msra.mxu0 0
        %1990 = vmatprep.subr.bf16.mxu0 0
        %1991 = vmatpush1.bf16.msra.mxu0 0
        %1992 = vmatprep.subr.bf16.mxu0 0
        %1993 = vmatpush1.bf16.msra.mxu0 %v1976
        %1994 = vmatprep.subr.bf16.mxu0 0
        %1995 = vmatpush2.bf16.msra.mxu0 0
        %1996 = vmatprep.subr.bf16.mxu0 0
        %1997 = vmatpush2.bf16.msra.mxu0 0
        %1998 = vmatprep.subr.bf16.mxu0 0
        %1999 = vmatpush2.bf16.msra.mxu0 0
        %2000 = vmatprep.subr.bf16.mxu0 0
        %2001 = vmatpush2.bf16.msra.mxu0 0
        %2002 = vmatprep.subr.bf16.mxu0 0
        %2003 = vmatpush2.bf16.msra.mxu0 0
        %2004 = vmatprep.subr.bf16.mxu0 0
        %2005 = vmatpush2.bf16.msra.mxu0 0
        %2006 = vmatprep.subr.bf16.mxu0 0
        %2007 = vmatpush2.bf16.msra.mxu0 0
        %2008 = vmatprep.subr.bf16.mxu0 0
        %2009 = vmatpush2.bf16.msra.mxu0 0
        %2010 = vmatprep.mubr.bf16.mxu0 0
        %2011 = vmatmul.mubr.bf16.gmra.mxu0 %v1973
        %v2012 = vpop.f32.mrf.mxu0
        %v2013 = vadd.f32 0.0, %v2012
        %v2014 = vpop.f32.mrf.mxu0
        %v2015 = vpop.f32.mrf.mxu0
        %v2016 = vpop.f32.mrf.mxu0
        %2017 = vdwg.mxu0
        %v2018 = vrcp.pop %v1819
        %v2019 = vrcp.pop %v1822
        %v2020 = vrcp.pop %v1825
        %v2021 = vrcp.pop %v1828
        %v2022 = vmul.f32 %v1875, %v2018
        %v2023 = vmul.f32 %v1921, %v2019
        %v2024 = vmul.f32 %v1967, %v2020
        %v2025 = vmul.f32 %v2013, %v2021
        %v2026 = vpack.c.bf16 %v2022, %v2022
        %v2027 = vpack.c.bf16 %v2023, %v2023
        %v2028 = vpack.c.bf16 %v2024, %v2024
        %v2029 = vpack.c.bf16 %v2025, %v2025
        %v2031 = vsel %vm1608, %v2026, 0
        %v2034 = vsel %vm1836, %v1357, 0
        %2036 = vmatprep.subr.bf16.mxu0 0
        %2037 = vmatpush1.bf16.msra.mxu0 0
        %2038 = vmatprep.subr.bf16.mxu0 0
        %2039 = vmatpush1.bf16.msra.mxu0 0
        %2040 = vmatprep.subr.bf16.mxu0 0
        %2041 = vmatpush1.bf16.msra.mxu0 0
        %2042 = vmatprep.subr.bf16.mxu0 0
        %2043 = vmatpush1.bf16.msra.mxu0 0
        %2044 = vmatprep.subr.bf16.mxu0 0
        %2045 = vmatpush1.bf16.msra.mxu0 0
        %2046 = vmatprep.subr.bf16.mxu0 0
        %2047 = vmatpush1.bf16.msra.mxu0 0
        %2048 = vmatprep.subr.bf16.mxu0 0
        %2049 = vmatpush1.bf16.msra.mxu0 0
        %2050 = vmatprep.subr.bf16.mxu0 0
        %2051 = vmatpush1.bf16.msra.mxu0 %v2034
        %2052 = vmatprep.subr.bf16.mxu0 0
        %2053 = vmatpush2.bf16.msra.mxu0 0
        %2054 = vmatprep.subr.bf16.mxu0 0
        %2055 = vmatpush2.bf16.msra.mxu0 0
        %2056 = vmatprep.subr.bf16.mxu0 0
        %2057 = vmatpush2.bf16.msra.mxu0 0
        %2058 = vmatprep.subr.bf16.mxu0 0
        %2059 = vmatpush2.bf16.msra.mxu0 0
        %2060 = vmatprep.subr.bf16.mxu0 0
        %2061 = vmatpush2.bf16.msra.mxu0 0
        %2062 = vmatprep.subr.bf16.mxu0 0
        %2063 = vmatpush2.bf16.msra.mxu0 0
        %2064 = vmatprep.subr.bf16.mxu0 0
        %2065 = vmatpush2.bf16.msra.mxu0 0
        %2066 = vmatprep.subr.bf16.mxu0 0
        %2067 = vmatpush2.bf16.msra.mxu0 0
        %2068 = vmatprep.mubr.bf16.mxu0 0
        %2069 = vmatmul.mubr.bf16.gmra.mxu0 %v2031
        %v2070 = vpop.f32.mrf.mxu0
        %v2071 = vadd.f32 0.0, %v2070
        %v2072 = vpop.f32.mrf.mxu0
        %v2073 = vpop.f32.mrf.mxu0
        %v2074 = vpop.f32.mrf.mxu0
        %2075 = vdwg.mxu0
        %v2077 = vsel %vm1608, %v2027, 0
        %v2080 = vsel %vm1836, %v1358, 0
        %2082 = vmatprep.subr.bf16.mxu0 0
        %2083 = vmatpush1.bf16.msra.mxu0 0
        %2084 = vmatprep.subr.bf16.mxu0 0
        %2085 = vmatpush1.bf16.msra.mxu0 0
        %2086 = vmatprep.subr.bf16.mxu0 0
        %2087 = vmatpush1.bf16.msra.mxu0 0
        %2088 = vmatprep.subr.bf16.mxu0 0
        %2089 = vmatpush1.bf16.msra.mxu0 0
        %2090 = vmatprep.subr.bf16.mxu0 0
        %2091 = vmatpush1.bf16.msra.mxu0 0
        %2092 = vmatprep.subr.bf16.mxu0 0
        %2093 = vmatpush1.bf16.msra.mxu0 0
        %2094 = vmatprep.subr.bf16.mxu0 0
        %2095 = vmatpush1.bf16.msra.mxu0 0
        %2096 = vmatprep.subr.bf16.mxu0 0
        %2097 = vmatpush1.bf16.msra.mxu0 %v2080
        %2098 = vmatprep.subr.bf16.mxu0 0
        %2099 = vmatpush2.bf16.msra.mxu0 0
        %2100 = vmatprep.subr.bf16.mxu0 0
        %2101 = vmatpush2.bf16.msra.mxu0 0
        %2102 = vmatprep.subr.bf16.mxu0 0
        %2103 = vmatpush2.bf16.msra.mxu0 0
        %2104 = vmatprep.subr.bf16.mxu0 0
        %2105 = vmatpush2.bf16.msra.mxu0 0
        %2106 = vmatprep.subr.bf16.mxu0 0
        %2107 = vmatpush2.bf16.msra.mxu0 0
        %2108 = vmatprep.subr.bf16.mxu0 0
        %2109 = vmatpush2.bf16.msra.mxu0 0
        %2110 = vmatprep.subr.bf16.mxu0 0
        %2111 = vmatpush2.bf16.msra.mxu0 0
        %2112 = vmatprep.subr.bf16.mxu0 0
        %2113 = vmatpush2.bf16.msra.mxu0 0
        %2114 = vmatprep.mubr.bf16.mxu0 0
        %2115 = vmatmul.mubr.bf16.gmra.mxu0 %v2077
        %v2116 = vpop.f32.mrf.mxu0
        %v2117 = vadd.f32 0.0, %v2116
        %v2118 = vpop.f32.mrf.mxu0
        %v2119 = vpop.f32.mrf.mxu0
        %v2120 = vpop.f32.mrf.mxu0
        %2121 = vdwg.mxu0
        %v2123 = vsel %vm1608, %v2028, 0
        %v2126 = vsel %vm1836, %v1359, 0
        %2128 = vmatprep.subr.bf16.mxu0 0
        %2129 = vmatpush1.bf16.msra.mxu0 0
        %2130 = vmatprep.subr.bf16.mxu0 0
        %2131 = vmatpush1.bf16.msra.mxu0 0
        %2132 = vmatprep.subr.bf16.mxu0 0
        %2133 = vmatpush1.bf16.msra.mxu0 0
        %2134 = vmatprep.subr.bf16.mxu0 0
        %2135 = vmatpush1.bf16.msra.mxu0 0
        %2136 = vmatprep.subr.bf16.mxu0 0
        %2137 = vmatpush1.bf16.msra.mxu0 0
        %2138 = vmatprep.subr.bf16.mxu0 0
        %2139 = vmatpush1.bf16.msra.mxu0 0
        %2140 = vmatprep.subr.bf16.mxu0 0
        %2141 = vmatpush1.bf16.msra.mxu0 0
        %2142 = vmatprep.subr.bf16.mxu0 0
        %2143 = vmatpush1.bf16.msra.mxu0 %v2126
        %2144 = vmatprep.subr.bf16.mxu0 0
        %2145 = vmatpush2.bf16.msra.mxu0 0
        %2146 = vmatprep.subr.bf16.mxu0 0
        %2147 = vmatpush2.bf16.msra.mxu0 0
        %2148 = vmatprep.subr.bf16.mxu0 0
        %2149 = vmatpush2.bf16.msra.mxu0 0
        %2150 = vmatprep.subr.bf16.mxu0 0
        %2151 = vmatpush2.bf16.msra.mxu0 0
        %2152 = vmatprep.subr.bf16.mxu0 0
        %2153 = vmatpush2.bf16.msra.mxu0 0
        %2154 = vmatprep.subr.bf16.mxu0 0
        %2155 = vmatpush2.bf16.msra.mxu0 0
        %2156 = vmatprep.subr.bf16.mxu0 0
        %2157 = vmatpush2.bf16.msra.mxu0 0
        %2158 = vmatprep.subr.bf16.mxu0 0
        %2159 = vmatpush2.bf16.msra.mxu0 0
        %2160 = vmatprep.mubr.bf16.mxu0 0
        %2161 = vmatmul.mubr.bf16.gmra.mxu0 %v2123
        %v2162 = vpop.f32.mrf.mxu0
        %v2163 = vadd.f32 0.0, %v2162
        %v2164 = vpop.f32.mrf.mxu0
        %v2165 = vpop.f32.mrf.mxu0
        %v2166 = vpop.f32.mrf.mxu0
        %2167 = vdwg.mxu0
        %v2169 = vsel %vm1608, %v2029, 0
        %v2172 = vsel %vm1836, %v1360, 0
        %2174 = vmatprep.subr.bf16.mxu0 0
        %2175 = vmatpush1.bf16.msra.mxu0 0
        %2176 = vmatprep.subr.bf16.mxu0 0
        %2177 = vmatpush1.bf16.msra.mxu0 0
        %2178 = vmatprep.subr.bf16.mxu0 0
        %2179 = vmatpush1.bf16.msra.mxu0 0
        %2180 = vmatprep.subr.bf16.mxu0 0
        %2181 = vmatpush1.bf16.msra.mxu0 0
        %2182 = vmatprep.subr.bf16.mxu0 0
        %2183 = vmatpush1.bf16.msra.mxu0 0
        %2184 = vmatprep.subr.bf16.mxu0 0
        %2185 = vmatpush1.bf16.msra.mxu0 0
        %2186 = vmatprep.subr.bf16.mxu0 0
        %2187 = vmatpush1.bf16.msra.mxu0 0
        %2188 = vmatprep.subr.bf16.mxu0 0
        %2189 = vmatpush1.bf16.msra.mxu0 %v2172
        %2190 = vmatprep.subr.bf16.mxu0 0
        %2191 = vmatpush2.bf16.msra.mxu0 0
        %2192 = vmatprep.subr.bf16.mxu0 0
        %2193 = vmatpush2.bf16.msra.mxu0 0
        %2194 = vmatprep.subr.bf16.mxu0 0
        %2195 = vmatpush2.bf16.msra.mxu0 0
        %2196 = vmatprep.subr.bf16.mxu0 0
        %2197 = vmatpush2.bf16.msra.mxu0 0
        %2198 = vmatprep.subr.bf16.mxu0 0
        %2199 = vmatpush2.bf16.msra.mxu0 0
        %2200 = vmatprep.subr.bf16.mxu0 0
        %2201 = vmatpush2.bf16.msra.mxu0 0
        %2202 = vmatprep.subr.bf16.mxu0 0
        %2203 = vmatpush2.bf16.msra.mxu0 0
        %2204 = vmatprep.subr.bf16.mxu0 0
        %2205 = vmatpush2.bf16.msra.mxu0 0
        %2206 = vmatprep.mubr.bf16.mxu0 0
        %2207 = vmatmul.mubr.bf16.gmra.mxu0 %v2169
        %v2208 = vpop.f32.mrf.mxu0
        %v2209 = vadd.f32 0.0, %v2208
        %v2210 = vpop.f32.mrf.mxu0
        %v2211 = vpop.f32.mrf.mxu0
        %v2212 = vpop.f32.mrf.mxu0
        %2213 = vdwg.mxu0
        %v2214 = vsel %vm889, %v2071, 0.0
        %v2215 = vsel %vm889, %v2117, 0.0
        %v2216 = vadd.f32 %v2214, %v2215
        %v2217 = vsel %vm889, %v2163, 0.0
        %v2218 = vadd.f32 %v2216, %v2217
        %v2219 = vsel %vm889, %v2209, 0.0
        %v2220 = vadd.f32 %v2218, %v2219
        %v2222 = vlaneseq
        %v2223 = vshrl.u32 %v2222, 7
        %v2224 = vsub.s32 0, %v2223
        %v2225 = vrot.slane %v1361, %v2224
        %v2227 = vadd.f32 %v2220, %v2225
        %v2228 = vadd.f32 %v846, %v2227
        %v2229 = vsel %vm889, %v2228, 0.0
        %2230 = vadd.xlane.f32.xlu0 %v2229
        %v2231 = vpop.xlane.xlu0 %2230
        %v2232 = vrcp.pop 32.0
        %v2233 = vmul.f32 %v2231, %v2232
        %v2234 = vsub.f32 %v2228, %v2233
        %v2235 = vmul.f32 %v2234, %v2234
        %v2236 = vsel %vm889, %v2235, 0.0
        %2237 = vadd.xlane.f32.xlu0 %v2236
        %v2238 = vpop.xlane.xlu0 %2237
        %v2239 = vmul.f32 %v2238, %v2232
        %v2240 = vadd.f32 %v2239, 1e-05
        %v2241 = vrsqrt.pop %v2240
        %v2242 = vmul.f32 %v2234, %v2241
        %v2244 = vlaneseq
        %v2245 = vshrl.u32 %v2244, 7
        %v2246 = vsub.s32 0, %v2245
        %v2247 = vrot.slane %v1362, %v2246
        %v2249 = vmul.f32 %v2242, %v2247
        %v2251 = vlaneseq
        %v2252 = vshrl.u32 %v2251, 7
        %v2253 = vsub.s32 0, %v2252
        %v2254 = vrot.slane %v1363, %v2253
        %v2256 = vadd.f32 %v2249, %v2254
        %v2257 = vpack.c.bf16 %v2256, %v2256
        %v2259 = vlaneseq
        %v2260 = vshrl.u32 %v2259, 7
        %v2261 = vsub.s32 0, %v2260
        %v2262 = vrot.slane %v1368, %v2261
        %v2268 = vunpack.c.l.b16 %v1364
        %v2269 = vunpack.c.l.b16 %v1365
        %v2270 = vunpack.c.l.b16 %v1366
        %v2271 = vunpack.c.l.b16 %v1367
        %v2272 = vpack.c.b16 %v2269, %v2268
        %v2273 = vpack.c.b16 %v2271, %v2270
        %v2277 = vsel %vm889, %v2257, 0
        %2279 = vmatprep.subr.bf16.mxu0 0
        %2280 = vmatpush1.bf16.msra.mxu0 0
        %2281 = vmatprep.subr.bf16.mxu0 0
        %2282 = vmatpush1.bf16.msra.mxu0 0
        %2283 = vmatprep.subr.bf16.mxu0 0
        %2284 = vmatpush1.bf16.msra.mxu0 0
        %2285 = vmatprep.subr.bf16.mxu0 0
        %2286 = vmatpush1.bf16.msra.mxu0 0
        %2287 = vmatprep.subr.bf16.mxu0 0
        %2288 = vmatpush1.bf16.msra.mxu0 0
        %2289 = vmatprep.subr.bf16.mxu0 0
        %2290 = vmatpush1.bf16.msra.mxu0 0
        %2291 = vmatprep.subr.bf16.mxu0 0
        %2292 = vmatpush1.bf16.msra.mxu0 %v2273
        %2293 = vmatprep.subr.bf16.mxu0 0
        %2294 = vmatpush1.bf16.msra.mxu0 %v2272
        %2295 = vmatprep.subr.bf16.mxu0 0
        %2296 = vmatpush2.bf16.msra.mxu0 0
        %2297 = vmatprep.subr.bf16.mxu0 0
        %2298 = vmatpush2.bf16.msra.mxu0 0
        %2299 = vmatprep.subr.bf16.mxu0 0
        %2300 = vmatpush2.bf16.msra.mxu0 0
        %2301 = vmatprep.subr.bf16.mxu0 0
        %2302 = vmatpush2.bf16.msra.mxu0 0
        %2303 = vmatprep.subr.bf16.mxu0 0
        %2304 = vmatpush2.bf16.msra.mxu0 0
        %2305 = vmatprep.subr.bf16.mxu0 0
        %2306 = vmatpush2.bf16.msra.mxu0 0
        %2307 = vmatprep.subr.bf16.mxu0 0
        %2308 = vmatpush2.bf16.msra.mxu0 0
        %2309 = vmatprep.subr.bf16.mxu0 0
        %2310 = vmatpush2.bf16.msra.mxu0 0
        %2311 = vmatprep.mubr.bf16.mxu0 0
        %2312 = vmatmul.mubr.bf16.gmra.mxu0 %v2277
        %v2313 = vpop.f32.mrf.mxu0
        %v2314 = vadd.f32 %v2262, %v2313
        %v2315 = vpop.f32.mrf.mxu0
        %v2316 = vpop.f32.mrf.mxu0
        %v2317 = vpop.f32.mrf.mxu0
        %2318 = vdwg.mxu0
        %v2319 = vmax.f32 %v2314, 0.0
        %v2320 = vpack.c.bf16 %v2319, %v2319
        %v2322 = vlaneseq
        %v2323 = vshrl.u32 %v2322, 7
        %v2324 = vsub.s32 0, %v2323
        %v2325 = vrot.slane %v1377, %v2324
        %v2335 = vunpack.c.l.b16 %v1369
        %v2336 = vunpack.c.l.b16 %v1370
        %v2337 = vunpack.c.l.b16 %v1371
        %v2338 = vunpack.c.l.b16 %v1372
        %v2339 = vunpack.c.l.b16 %v1373
        %v2340 = vunpack.c.l.b16 %v1374
        %v2341 = vunpack.c.l.b16 %v1375
        %v2342 = vunpack.c.l.b16 %v1376
        %v2343 = vpack.c.b16 %v2336, %v2335
        %v2344 = vpack.c.b16 %v2338, %v2337
        %v2345 = vpack.c.b16 %v2340, %v2339
        %v2346 = vpack.c.b16 %v2342, %v2341
        %vm2351 = vcmask 523264
        %v2353 = vsel %vm2351, %v2320, 0
        %2355 = vmatprep.subr.bf16.mxu0 0
        %2356 = vmatpush1.bf16.msra.mxu0 0
        %2357 = vmatprep.subr.bf16.mxu0 0
        %2358 = vmatpush1.bf16.msra.mxu0 0
        %2359 = vmatprep.subr.bf16.mxu0 0
        %2360 = vmatpush1.bf16.msra.mxu0 0
        %2361 = vmatprep.subr.bf16.mxu0 0
        %2362 = vmatpush1.bf16.msra.mxu0 0
        %2363 = vmatprep.subr.bf16.mxu0 0
        %2364 = vmatpush1.bf16.msra.mxu0 %v2346
        %2365 = vmatprep.subr.bf16.mxu0 0
        %2366 = vmatpush1.bf16.msra.mxu0 %v2345
        %2367 = vmatprep.subr.bf16.mxu0 0
        %2368 = vmatpush1.bf16.msra.mxu0 %v2344
        %2369 = vmatprep.subr.bf16.mxu0 0
        %2370 = vmatpush1.bf16.msra.mxu0 %v2343
        %2371 = vmatprep.subr.bf16.mxu0 0
        %2372 = vmatpush2.bf16.msra.mxu0 0
        %2373 = vmatprep.subr.bf16.mxu0 0
        %2374 = vmatpush2.bf16.msra.mxu0 0
        %2375 = vmatprep.subr.bf16.mxu0 0
        %2376 = vmatpush2.bf16.msra.mxu0 0
        %2377 = vmatprep.subr.bf16.mxu0 0
        %2378 = vmatpush2.bf16.msra.mxu0 0
        %2379 = vmatprep.subr.bf16.mxu0 0
        %2380 = vmatpush2.bf16.msra.mxu0 0
        %2381 = vmatprep.subr.bf16.mxu0 0
        %2382 = vmatpush2.bf16.msra.mxu0 0
        %2383 = vmatprep.subr.bf16.mxu0 0
        %2384 = vmatpush2.bf16.msra.mxu0 0
        %2385 = vmatprep.subr.bf16.mxu0 0
        %2386 = vmatpush2.bf16.msra.mxu0 0
        %2387 = vmatprep.mubr.bf16.mxu0 0
        %2388 = vmatmul.mubr.bf16.gmra.mxu0 %v2353
        %v2389 = vpop.f32.mrf.mxu0
        %v2390 = vadd.f32 %v2325, %v2389
        %v2391 = vpop.f32.mrf.mxu0
        %v2392 = vpop.f32.mrf.mxu0
        %v2393 = vpop.f32.mrf.mxu0
        %2394 = vdwg.mxu0
        %v2395 = vadd.f32 %v2256, %v2390
        %v2396 = vsel %vm889, %v2395, 0.0
        %2397 = vadd.xlane.f32.xlu0 %v2396
        %v2398 = vpop.xlane.xlu0 %2397
        %v2399 = vmul.f32 %v2398, %v2232
        %v2400 = vsub.f32 %v2395, %v2399
        %v2401 = vmul.f32 %v2400, %v2400
        %v2402 = vsel %vm889, %v2401, 0.0
        %2403 = vadd.xlane.f32.xlu0 %v2402
        %v2404 = vpop.xlane.xlu0 %2403
        %v2405 = vmul.f32 %v2404, %v2232
        %v2406 = vadd.f32 %v2405, 1e-05
        %v2407 = vrsqrt.pop %v2406
        %v2408 = vmul.f32 %v2400, %v2407
        %v2410 = vlaneseq
        %v2411 = vshrl.u32 %v2410, 7
        %v2412 = vsub.s32 0, %v2411
        %v2413 = vrot.slane %v1378, %v2412
        %v2415 = vmul.f32 %v2408, %v2413
        %v2417 = vlaneseq
        %v2418 = vshrl.u32 %v2417, 7
        %v2419 = vsub.s32 0, %v2418
        %v2420 = vrot.slane %v1379, %v2419
        %v2422 = vadd.f32 %v2415, %v2420
        %2423 = vst.msk [vmem:[#allocation2] sm:$0xff] %vm889, %v2422
        %p2424 = scmp.eq.s32.totalorder %s44, 1
        // Predicated region
        $region109: #{tpu_custom_call.1} parent=83 // pred_check
          %p2425 = pneg %p2424
        $region110: #{tpu_custom_call.1} parent=83 // pred_check_branch
          %2427 = sbr.rel (%p2425) target = $region112
        $region111: #{tpu_custom_call.1} parent=83 // pred_region
          %v2428 = vld [vmem:[#allocation2] sm:$0xff]
          %v2429 = vld [vmem:[%s14] sm:$0x1]
          %v2430 = vld [vmem:[%s15] sm:$0x1]
          %v2431 = vsel %vm889, %v2428, 0.0
          %2432 = vadd.xlane.f32.xlu0 %v2431
          %v2433 = vpop.xlane.xlu0 %2432
          %v2434 = vmul.f32 %v2433, %v2232
          %v2435 = vsub.f32 %v2428, %v2434
          %v2436 = vmul.f32 %v2435, %v2435
          %v2437 = vsel %vm889, %v2436, 0.0
          %2438 = vadd.xlane.f32.xlu0 %v2437
          %v2439 = vpop.xlane.xlu0 %2438
          %v2440 = vmul.f32 %v2439, %v2232
          %v2441 = vadd.f32 %v2440, 1e-05
          %v2442 = vrsqrt.pop %v2441
          %v2443 = vmul.f32 %v2435, %v2442
          %v2445 = vlaneseq
          %v2446 = vshrl.u32 %v2445, 7
          %v2447 = vsub.s32 0, %v2446
          %v2448 = vrot.slane %v2429, %v2447
          %v2450 = vmul.f32 %v2443, %v2448
          %v2452 = vlaneseq
          %v2453 = vshrl.u32 %v2452, 7
          %v2454 = vsub.s32 0, %v2453
          %v2455 = vrot.slane %v2430, %v2454
          %v2457 = vadd.f32 %v2450, %v2455
          %2458 = vst.msk [vmem:[%s806] sm:$0xff] %vm889, %v2457
        $region112: #{tpu_custom_call.1} parent=83 // pred_fallthru
          _
        %s2459 = sand.u32 %s465, 1
        %s2460 = scalar_lea.sflag [#allocation7], %s2459
        %s2461 = sand.u32 %s465, 1
        %s2462 = smul.addr %s2461, 8
        %s2463 = scalar_lea.vmem [#allocation14], %s2462
        // Predicated region
        $region113: #{tpu_custom_call.1} parent=83 // pred_check
          %p2464 = pneg %p475
        $region114: #{tpu_custom_call.1} parent=83 // pred_check_branch
          %2466 = sbr.rel (%p2464) target = $region116
        $region115: #{tpu_custom_call.1} parent=83 // pred_region
          %s2468 = ssub.s32 128, 128
          %2469 = vsyncadd %s2460, %s2468
          %s2470 = smul.addr %s43, 128
          %s2471 = scalar_lea.hbm %s16, %s2470
          %s2473 = sshll.u32 %s2463, 4
          %s2474 = int_to_ptr.vmem [resolvable:$true] %s2473
          %2476 = dma.vmem_to_hbm [thread:$0]  %s2474, 128, %s2471, %s2460
        $region116: #{tpu_custom_call.1} parent=83 // pred_fallthru
          _
      $region84: #{tpu_custom_call.1} parent=5 // pred_fallthru
        _
      %p2477 = scmp.le.s32.totalorder 2, %s34
      // Predicated region
      $region117: #{tpu_custom_call.1} parent=5 // pred_check
        %p2478 = pneg %p2477
      $region118: #{tpu_custom_call.1} parent=5 // pred_check_branch
        %2480 = sbr.rel (%p2478) target = $region120
      $region119: #{tpu_custom_call.1} parent=5 // pred_region
        %s2481 = ssub.s32 %s34, 2
        // Predicated region
        $region121: #{tpu_custom_call.1} parent=119 // pred_check
          %p2482 = pneg %p481
        $region122: #{tpu_custom_call.1} parent=119 // pred_check_branch
          %2484 = sbr.rel (%p2482) target = $region124
        $region123: #{tpu_custom_call.1} parent=119 // pred_region
          %s2485 = sand.u32 %s466, 1
          %s2486 = scalar_lea.sflag [#allocation7], %s2485
          %s2487 = sand.u32 %s466, 1
          %s2488 = smul.addr %s2487, 8
          %s2489 = scalar_lea.vmem [#allocation14], %s2488
          %2490 = dma.done %s2486, 128
        $region124: #{tpu_custom_call.1} parent=119 // pred_fallthru
          _
      $region120: #{tpu_custom_call.1} parent=5 // pred_fallthru
        _
    $region6: #{tpu_custom_call.1} parent=1 // loop_footer
      %s38 = sadd.s32 1, %s34
    $region7: #{tpu_custom_call.1} parent=1 // loop_footer_branch
      %33 = sbr.rel target = $region3
    $region8: #{tpu_custom_call.1} parent=1 // loop_exit
      _
    %2491 = vsyncpa [#allocation6], 1
    %s2492 = scalar_lea.sflag [#allocation6], 1
    %2493 = vsyncpa %s2492, 1
    %2494 = vsyncpa [#allocation9], 1
    %s2495 = scalar_lea.sflag [#allocation9], 1
    %2496 = vsyncpa %s2495, 1
    %2497 = vsyncpa [#allocation12], 1
    %s2498 = scalar_lea.sflag [#allocation12], 1
    %2499 = vsyncpa %s2498, 1
    %2500 = vsyncpa [#allocation7], 1
    %s2501 = scalar_lea.sflag [#allocation7], 1
    %2502 = vsyncpa %s2501, 1

</llo_original>
